<compile_context>
chip_gen: v5e
topology: v5e:2x2
jax: 0.10.0
libtpu: 0.0.40
codegen_flags: <defaults>
</compile_context>

<pallas_src>
import functools

import jax
import jax.numpy as jnp
from jax import lax
from jax.experimental import pallas as pl
from jax.experimental.pallas import tpu as pltpu


# ----------------------------- Pallas kernel ------------------------------ #

def _conv1d_block_kernel(*refs, use_proj, has_deep, kernel_size, nlayers,
                         seq_len):
    it = iter(refs)
    x_ref = next(it)
    if use_proj:
        wres_ref = next(it)
        bres_ref = next(it)
    w0_ref = next(it)
    b0_ref = next(it)
    if has_deep:
        wr_ref = next(it)
        br_ref = next(it)
    o_ref = next(it)

    x = x_ref[...]                      # (C_in, W) f32, W = batch_tile * L
    W = x.shape[-1]
    pad = (kernel_size - 1) // 2

    # Hoisted, segment-aware boundary masks (depend only on tap offset d and L;
    # computed once, reused by every layer). col % L keeps lane rolls from
    # leaking across packed batch boundaries.
    pos = lax.broadcasted_iota(jnp.int32, (1, W), 1) % seq_len
    masks = {}
    for k in range(kernel_size):
        d = k - pad
        if d != 0:
            masks[d] = jnp.logical_and(pos + d >= 0, pos + d < seq_len)

    def conv(a, w_taps, b):
        # Per-tap MXU matmuls, f32 accumulation.
        #   a:      (C, W)  f32 activations
        #   w_taps: (K, C_out, C) bf16 dense (block-diagonal) per-tap weights
        #   b:      (C_out, 1) f32 bias
        a_bf = a.astype(jnp.bfloat16)
        acc = jnp.dot(w_taps[pad], a_bf,                 # d == 0 tap, no shift
                      preferred_element_type=jnp.float32)
        for k in range(kernel_size):
            d = k - pad
            if d == 0:
                continue
            # rolled[:, l] = a[:, (l + d) mod W]; wrap / segment-crossing masked.
            rolled = pltpu.roll(a, (-d) % W, axis=1)
            tap = jnp.where(masks[d], rolled, 0.0).astype(jnp.bfloat16)
            acc = acc + jnp.dot(w_taps[k], tap,
                                preferred_element_type=jnp.float32)
        return acc + b

    # Residual path (1x1 conv only when c_in != c_out, as in the module).
    if use_proj:
        res = jnp.dot(wres_ref[...], x.astype(jnp.bfloat16),
                      preferred_element_type=jnp.float32) + bres_ref[...]
    else:
        res = x

    # Stack of nlayers grouped convs (no inter-layer activation, as in module).
    cur = conv(x, w0_ref[...], b0_ref[...])
    if has_deep:
        for i in range(nlayers - 1):
            cur = conv(cur, wr_ref[i], br_ref[i])

    # TODO(synk): nn.Dropout is stochastic in train mode; here it is the
    # inference-time identity.
    o_ref[...] = jnp.maximum(cur + res, 0.0).astype(o_ref.dtype)


def conv1d_block(x, packed_params, *, kernel_size, nlayers, use_proj,
                 batch_tile=None):
    N, c_in, L = x.shape
    wres, bres, w0, b0, wr, br = packed_params
    c_out = w0.shape[1]
    has_deep = (nlayers > 1) and (wr is not None)

    # ---- per-step VMEM working-set estimate (bytes) -----------------------
    def _workset_bytes(bt):
        w = bt * L
        io = 2 * c_in * w * 4 + 2 * c_out * w * 4        # double-buffered x/out
        interm = (c_in * w * 4                            # x held in f32
                  + max(c_in, c_out) * w * 2              # bf16 tap operand
                  + 3 * c_out * w * 4)                    # acc / cur / res f32
        return io + interm

    weight_bytes = sum(int(a.size) * a.dtype.itemsize
                       for a in (wres, bres, w0, b0, wr, br) if a is not None)

    # ---- batch-tile selection: prefer >=2 grid steps (megacore) and a tile
    #      that fits a conservative VMEM budget (v7x: 64 MiB physical). -------
    if batch_tile is None:
        budget = 24 << 20
        divisors = [d for d in range(1, N + 1) if N % d == 0]
        if N >= 2:
            cand = [d for d in divisors if N // d >= 2] or [1]
        else:
            cand = divisors
        fits = [d for d in cand if _workset_bytes(d) <= budget]
        batch_tile = max(fits) if fits else min(cand)
    assert N % batch_tile == 0
    num_tiles = N // batch_tile
    W = batch_tile * L

    vmem_limit = int(min(max(2 * (_workset_bytes(batch_tile) + weight_bytes),
                             16 << 20), 48 << 20))

    # Layout plumbing only: pack batch into the lane dimension -> (C, N*L).
    x2 = jnp.transpose(x, (1, 0, 2)).reshape(c_in, N * L)

    kern = functools.partial(_conv1d_block_kernel, use_proj=use_proj,
                             has_deep=has_deep, kernel_size=kernel_size,
                             nlayers=nlayers, seq_len=L)

    def const_spec(shape):
        # Constant block index -> single buffer (no wasted second pipeline buf).
        nd = len(shape)
        return pl.BlockSpec(shape, lambda i, _nd=nd: (0,) * _nd,
                            pipeline_mode=pl.Buffered(1))

    inputs = [x2]
    in_specs = [pl.BlockSpec((c_in, W), lambda i: (0, i))]   # x (lane-packed)
    if use_proj:
        inputs += [wres, bres]
        in_specs += [const_spec(wres.shape), const_spec(bres.shape)]
    inputs += [w0, b0]
    in_specs += [const_spec(w0.shape), const_spec(b0.shape)]
    if has_deep:
        inputs += [wr, br]
        in_specs += [const_spec(wr.shape), const_spec(br.shape)]

    # Advisory cost estimate (dense per-tap matmul work actually issued).
    flops = 2 * N * L * c_out * kernel_size * c_in
    if has_deep:
        flops += 2 * N * L * c_out * kernel_size * c_out * (nlayers - 1)
    if use_proj:
        flops += 2 * N * L * c_out * c_in
    bytes_accessed = (int(x.size) * 4 + N * L * c_out * 4 + weight_bytes)
    cost = pl.CostEstimate(flops=flops, transcendentals=0,
                           bytes_accessed=bytes_accessed)

    out2 = pl.pallas_call(
        kern,
        out_shape=jax.ShapeDtypeStruct((c_out, N * L), x.dtype),
        grid_spec=pltpu.PrefetchScalarGridSpec(
            num_scalar_prefetch=0,
            grid=(num_tiles,),
            in_specs=in_specs,
            out_specs=pl.BlockSpec((c_out, W), lambda i: (0, i)),
        ),
        compiler_params=pltpu.CompilerParams(
            dimension_semantics=("parallel",),
            vmem_limit_bytes=vmem_limit),
        cost_estimate=cost,
    )(*inputs)

    return jnp.transpose(out2.reshape(c_out, N, L), (1, 0, 2))


# ------------------------ parameter init / packing ------------------------ #

def _weight_norm(v, g):
    # torch weight_norm with dim=0: per-output-filter norm over remaining dims.
    norm = jnp.sqrt(jnp.sum(v * v, axis=tuple(range(1, v.ndim)), keepdims=True))
    return g * v / norm


def init_params(key, c_in, c_out, kernel_size, nlayers, groups):
    ks = jax.random.split(key, 3 * (nlayers + 1))
    params = {}
    # convresid: weight_norm(Conv1d(c_in, c_out, 1))
    v = jax.random.normal(ks[0], (c_out, c_in, 1), jnp.float32) * 0.2
    g = jax.random.uniform(ks[1], (c_out, 1, 1), jnp.float32, 0.5, 1.5)
    params["res_w"] = _weight_norm(v, g)               # (c_out, c_in, 1)
    params["res_b"] = jax.random.normal(ks[2], (c_out,), jnp.float32) * 0.05
    params["conv_w"] = []
    params["conv_b"] = []
    for i in range(nlayers):
        ic = c_in if i == 0 else c_out
        v = jax.random.normal(ks[3 * (i + 1) + 0],
                              (c_out, ic // groups, kernel_size),
                              jnp.float32) * 0.2
        g = jax.random.uniform(ks[3 * (i + 1) + 1], (c_out, 1, 1),
                               jnp.float32, 0.5, 1.5)
        b = jax.random.normal(ks[3 * (i + 1) + 2], (c_out,), jnp.float32) * 0.05
        params["conv_w"].append(_weight_norm(v, g))    # grouped (c_out, ic/G, K)
        params["conv_b"].append(b)
    return params


def pack_for_kernel(params, c_in, c_out, kernel_size, nlayers, groups):
    def densify_taps(wg, ic):
        # grouped (c_out, ic//G, K) -> dense block-diagonal (c_out, ic, K),
        # then taps-major (K, c_out, ic) bf16 so the kernel does K per-tap
        # matmuls accumulating in f32.
        og, ig = c_out // groups, ic // groups
        dense = jnp.zeros((c_out, ic, kernel_size), jnp.float32)
        for g in range(groups):
            dense = dense.at[g * og:(g + 1) * og, g * ig:(g + 1) * ig, :].set(
                wg[g * og:(g + 1) * og])
        return jnp.transpose(dense, (2, 0, 1)).astype(jnp.bfloat16)

    wres = params["res_w"][:, :, 0].astype(jnp.bfloat16)     # (c_out, c_in)
    bres = params["res_b"][:, None]                          # (c_out, 1) f32
    w0 = densify_taps(params["conv_w"][0], c_in)             # (K, c_out, c_in)
    b0 = params["conv_b"][0][:, None]                        # (c_out, 1) f32
    if nlayers > 1:
        wr = jnp.stack([densify_taps(params["conv_w"][i], c_out)
                        for i in range(1, nlayers)])         # (nl-1,K,c_out,c_out)
        br = jnp.stack([params["conv_b"][i][:, None]
                        for i in range(1, nlayers)])         # (nl-1,c_out,1) f32
    else:
        wr, br = None, None
    return wres, bres, w0, b0, wr, br


# --------------------------- pure-JAX reference ---------------------------- #

def ref_forward(x, params, groups, kernel_size, use_proj):
    pad = (kernel_size - 1) // 2

    def conv(a, w, b, fgc, p):
        out = lax.conv_general_dilated(
            a, w, (1,), [(p, p)],
            dimension_numbers=("NCH", "OIH", "NCH"),
            feature_group_count=fgc,
            precision=lax.Precision.HIGHEST)
        return out + b[None, :, None]

    res = x
    if use_proj:
        res = conv(x, params["res_w"], params["res_b"], 1, 0)
    out = x
    for w, b in zip(params["conv_w"], params["conv_b"]):
        out = conv(out, w, b, groups, pad)
    # dropout == identity (inference)
    return jnp.maximum(out + res, 0.0)


# --------------------------------- main ------------------------------------ #

if __name__ == "__main__":
    N, C_IN, C_OUT, L = 2, 16, 32, 128
    KSIZE, NLAYERS, GROUPS = 3, 5, 8

    key = jax.random.PRNGKey(0)
    kx, kp = jax.random.split(key)
    x = jax.random.normal(kx, (N, C_IN, L), jnp.float32)

    params = init_params(kp, C_IN, C_OUT, KSIZE, NLAYERS, GROUPS)
    packed = pack_for_kernel(params, C_IN, C_OUT, KSIZE, NLAYERS, GROUPS)
    use_proj = C_IN != C_OUT

    out = conv1d_block(x, packed, kernel_size=KSIZE, nlayers=NLAYERS,
                       use_proj=use_proj)
    out = jax.block_until_ready(out)

    ref = ref_forward(x, params, GROUPS, KSIZE, use_proj)
    assert out.shape == (N, C_OUT, L)
    # Tolerance reflects bf16 MXU operands (f32 accumulation) across 5 stacked
    # conv layers vs the f32 HIGHEST-precision reference.
    assert bool(jnp.allclose(out, ref, atol=5e-2, rtol=5e-2)), \
        float(jnp.max(jnp.abs(out - ref)))

    print("KERNEL_OK")
</pallas_src>

<mosaic_0001>
module attributes {stable_mosaic.version = 11 : i64} {
  func.func @_conv1d_block_kernel(%arg0: i32, %arg1: memref<16x128xf32, #tpu.memory_space<vmem>>, %arg2: memref<32x16xbf16, #tpu.memory_space<vmem>>, %arg3: memref<32x1xf32, #tpu.memory_space<vmem>>, %arg4: memref<3x32x16xbf16, #tpu.memory_space<vmem>>, %arg5: memref<32x1xf32, #tpu.memory_space<vmem>>, %arg6: memref<4x3x32x32xbf16, #tpu.memory_space<vmem>>, %arg7: memref<4x32x1xf32, #tpu.memory_space<vmem>>, %arg8: memref<32x128xf32, #tpu.memory_space<vmem>>) attributes {dimension_semantics = [#tpu.dimension_semantics<parallel>], iteration_bounds = array<i64: 2>, scalar_prefetch = 0 : i64, scratch_operands = 0 : i64, tpu.core_type = #tpu.core_type<tc>, window_params = [{transform_indices = @transform_0, window_bounds = array<i64: 16, 128>}, {pipeline_mode = #tpu.pipeline_mode<synchronous>, transform_indices = @transform_1, window_bounds = array<i64: 32, 16>}, {pipeline_mode = #tpu.pipeline_mode<synchronous>, transform_indices = @transform_2, window_bounds = array<i64: 32, 1>}, {pipeline_mode = #tpu.pipeline_mode<synchronous>, transform_indices = @transform_3, window_bounds = array<i64: 3, 32, 16>}, {pipeline_mode = #tpu.pipeline_mode<synchronous>, transform_indices = @transform_4, window_bounds = array<i64: 32, 1>}, {pipeline_mode = #tpu.pipeline_mode<synchronous>, transform_indices = @transform_5, window_bounds = array<i64: 4, 3, 32, 32>}, {pipeline_mode = #tpu.pipeline_mode<synchronous>, transform_indices = @transform_6, window_bounds = array<i64: 4, 32, 1>}, {transform_indices = @transform_7, window_bounds = array<i64: 32, 128>}]} {
    %c0 = arith.constant 0 : index
    %c0_0 = arith.constant 0 : index
    %0 = vector.load %arg1[%c0, %c0_0] : memref<16x128xf32, #tpu.memory_space<vmem>>, vector<16x128xf32>
    %1 = tpu.iota {dimensions = array<i32: 1>} : vector<1x128xi32>
    %c128_i32 = arith.constant 128 : i32
    %c0_i32 = arith.constant 0 : i32
    %2 = arith.cmpi eq, %c128_i32, %c0_i32 : i32
    %c1_i32 = arith.constant 1 : i32
    %3 = arith.select %2, %c1_i32, %c128_i32 : i32
    %4 = vector.broadcast %3 : i32 to vector<1x128xi32>
    %5 = arith.remsi %1, %4 : vector<1x128xi32>
    %c0_i32_1 = arith.constant 0 : i32
    %6 = vector.broadcast %c0_i32_1 : i32 to vector<1x128xi32>
    %7 = arith.cmpi ne, %5, %6 : vector<1x128xi32>
    %c0_i32_2 = arith.constant 0 : i32
    %8 = vector.broadcast %c0_i32_2 : i32 to vector<1x128xi32>
    %9 = arith.cmpi slt, %5, %8 : vector<1x128xi32>
    %c0_i32_3 = arith.constant 0 : i32
    %10 = arith.cmpi slt, %3, %c0_i32_3 : i32
    %11 = vector.broadcast %10 : i1 to vector<1x128xi1>
    %12 = vector.broadcast %11 : vector<1x128xi1> to vector<1x128xi1>
    %13 = arith.xori %9, %12 : vector<1x128xi1>
    %14 = arith.andi %13, %7 : vector<1x128xi1>
    %15 = vector.broadcast %3 : i32 to vector<1x128xi32>
    %16 = arith.addi %5, %15 : vector<1x128xi32>
    %17 = arith.select %14, %16, %5 : vector<1x128xi1>, vector<1x128xi32>
    %c-1_i32 = arith.constant -1 : i32
    %18 = vector.broadcast %c-1_i32 : i32 to vector<1x128xi32>
    %19 = arith.addi %17, %18 : vector<1x128xi32>
    %c0_i32_4 = arith.constant 0 : i32
    %20 = vector.broadcast %c0_i32_4 : i32 to vector<1x128xi32>
    %21 = arith.cmpi sge, %19, %20 : vector<1x128xi32>
    %c-1_i32_5 = arith.constant -1 : i32
    %22 = vector.broadcast %c-1_i32_5 : i32 to vector<1x128xi32>
    %23 = arith.addi %17, %22 : vector<1x128xi32>
    %c128_i32_6 = arith.constant 128 : i32
    %24 = vector.broadcast %c128_i32_6 : i32 to vector<1x128xi32>
    %25 = arith.cmpi slt, %23, %24 : vector<1x128xi32>
    %26 = arith.andi %21, %25 : vector<1x128xi1>
    %c1_i32_7 = arith.constant 1 : i32
    %27 = vector.broadcast %c1_i32_7 : i32 to vector<1x128xi32>
    %28 = arith.addi %17, %27 : vector<1x128xi32>
    %c0_i32_8 = arith.constant 0 : i32
    %29 = vector.broadcast %c0_i32_8 : i32 to vector<1x128xi32>
    %30 = arith.cmpi sge, %28, %29 : vector<1x128xi32>
    %c1_i32_9 = arith.constant 1 : i32
    %31 = vector.broadcast %c1_i32_9 : i32 to vector<1x128xi32>
    %32 = arith.addi %17, %31 : vector<1x128xi32>
    %c128_i32_10 = arith.constant 128 : i32
    %33 = vector.broadcast %c128_i32_10 : i32 to vector<1x128xi32>
    %34 = arith.cmpi slt, %32, %33 : vector<1x128xi32>
    %35 = arith.andi %30, %34 : vector<1x128xi1>
    %c0_11 = arith.constant 0 : index
    %c0_12 = arith.constant 0 : index
    %36 = vector.load %arg2[%c0_11, %c0_12] : memref<32x16xbf16, #tpu.memory_space<vmem>>, vector<32x16xbf16>
    %37 = arith.truncf %0 : vector<16x128xf32> to vector<16x128xbf16>
    %cst = arith.constant dense<0.000000e+00> : vector<32x128xf32>
    %38 = tpu.matmul %36, %37, %cst {dimension_numbers = #tpu.dot_dimension_numbers<[1], [0], [0], [1], [0, 0, 1, 1], [], []>} : vector<32x16xbf16>, vector<16x128xbf16>, vector<32x128xf32> -> vector<32x128xf32>
    %c0_13 = arith.constant 0 : index
    %c0_14 = arith.constant 0 : index
    %39 = vector.load %arg3[%c0_13, %c0_14] : memref<32x1xf32, #tpu.memory_space<vmem>>, vector<32x1xf32>
    %40 = vector.broadcast %39 : vector<32x1xf32> to vector<32x128xf32>
    %41 = arith.addf %38, %40 : vector<32x128xf32>
    %c0_15 = arith.constant 0 : index
    %c0_16 = arith.constant 0 : index
    %c0_17 = arith.constant 0 : index
    %42 = vector.load %arg4[%c0_15, %c0_16, %c0_17] : memref<3x32x16xbf16, #tpu.memory_space<vmem>>, vector<3x32x16xbf16>
    %c0_18 = arith.constant 0 : index
    %c0_19 = arith.constant 0 : index
    %43 = vector.load %arg5[%c0_18, %c0_19] : memref<32x1xf32, #tpu.memory_space<vmem>>, vector<32x1xf32>
    %44 = arith.truncf %0 : vector<16x128xf32> to vector<16x128xbf16>
    %45 = vector.extract_strided_slice %42 {offsets = [1, 0, 0], sizes = [1, 32, 16], strides = [1, 1, 1]} : vector<3x32x16xbf16> to vector<1x32x16xbf16>
    %46 = vector.shape_cast %45 : vector<1x32x16xbf16> to vector<32x16xbf16>
    %cst_20 = arith.constant dense<0.000000e+00> : vector<32x128xf32>
    %47 = tpu.matmul %46, %44, %cst_20 {dimension_numbers = #tpu.dot_dimension_numbers<[1], [0], [0], [1], [0, 0, 1, 1], [], []>} : vector<32x16xbf16>, vector<16x128xbf16>, vector<32x128xf32> -> vector<32x128xf32>
    %c1_i32_21 = arith.constant 1 : i32
    %48 = tpu.dynamic_rotate %0 by %c1_i32_21 dim 1 : vector<16x128xf32>, i32 -> vector<16x128xf32>
    %cst_22 = arith.constant 0.000000e+00 : f32
    %49 = vector.shape_cast %26 : vector<1x128xi1> to vector<1x128xi1>
    %50 = vector.broadcast %49 : vector<1x128xi1> to vector<16x128xi1>
    %51 = vector.broadcast %cst_22 : f32 to vector<16x128xf32>
    %52 = arith.select %50, %48, %51 : vector<16x128xi1>, vector<16x128xf32>
    %53 = arith.truncf %52 : vector<16x128xf32> to vector<16x128xbf16>
    %54 = vector.extract_strided_slice %42 {offsets = [0, 0, 0], sizes = [1, 32, 16], strides = [1, 1, 1]} : vector<3x32x16xbf16> to vector<1x32x16xbf16>
    %55 = vector.shape_cast %54 : vector<1x32x16xbf16> to vector<32x16xbf16>
    %cst_23 = arith.constant dense<0.000000e+00> : vector<32x128xf32>
    %56 = tpu.matmul %55, %53, %cst_23 {dimension_numbers = #tpu.dot_dimension_numbers<[1], [0], [0], [1], [0, 0, 1, 1], [], []>} : vector<32x16xbf16>, vector<16x128xbf16>, vector<32x128xf32> -> vector<32x128xf32>
    %57 = arith.addf %47, %56 : vector<32x128xf32>
    %c127_i32 = arith.constant 127 : i32
    %58 = tpu.dynamic_rotate %0 by %c127_i32 dim 1 : vector<16x128xf32>, i32 -> vector<16x128xf32>
    %cst_24 = arith.constant 0.000000e+00 : f32
    %59 = vector.shape_cast %35 : vector<1x128xi1> to vector<1x128xi1>
    %60 = vector.broadcast %59 : vector<1x128xi1> to vector<16x128xi1>
    %61 = vector.broadcast %cst_24 : f32 to vector<16x128xf32>
    %62 = arith.select %60, %58, %61 : vector<16x128xi1>, vector<16x128xf32>
    %63 = arith.truncf %62 : vector<16x128xf32> to vector<16x128xbf16>
    %64 = vector.extract_strided_slice %42 {offsets = [2, 0, 0], sizes = [1, 32, 16], strides = [1, 1, 1]} : vector<3x32x16xbf16> to vector<1x32x16xbf16>
    %65 = vector.shape_cast %64 : vector<1x32x16xbf16> to vector<32x16xbf16>
    %cst_25 = arith.constant dense<0.000000e+00> : vector<32x128xf32>
    %66 = tpu.matmul %65, %63, %cst_25 {dimension_numbers = #tpu.dot_dimension_numbers<[1], [0], [0], [1], [0, 0, 1, 1], [], []>} : vector<32x16xbf16>, vector<16x128xbf16>, vector<32x128xf32> -> vector<32x128xf32>
    %67 = arith.addf %57, %66 : vector<32x128xf32>
    %68 = vector.broadcast %43 : vector<32x1xf32> to vector<32x128xf32>
    %69 = arith.addf %67, %68 : vector<32x128xf32>
    %c0_26 = arith.constant 0 : index
    %c0_27 = arith.constant 0 : index
    %c0_28 = arith.constant 0 : index
    %c0_29 = arith.constant 0 : index
    %70 = vector.load %arg6[%c0_26, %c0_27, %c0_28, %c0_29] : memref<4x3x32x32xbf16, #tpu.memory_space<vmem>>, vector<1x3x32x32xbf16>
    %71 = vector.shape_cast %70 : vector<1x3x32x32xbf16> to vector<3x32x32xbf16>
    %c0_30 = arith.constant 0 : index
    %c0_31 = arith.constant 0 : index
    %c0_32 = arith.constant 0 : index
    %72 = vector.load %arg7[%c0_30, %c0_31, %c0_32] : memref<4x32x1xf32, #tpu.memory_space<vmem>>, vector<1x32x1xf32>
    %73 = vector.shape_cast %72 : vector<1x32x1xf32> to vector<32x1xf32>
    %74 = arith.truncf %69 : vector<32x128xf32> to vector<32x128xbf16>
    %75 = vector.extract_strided_slice %71 {offsets = [1, 0, 0], sizes = [1, 32, 32], strides = [1, 1, 1]} : vector<3x32x32xbf16> to vector<1x32x32xbf16>
    %76 = vector.shape_cast %75 : vector<1x32x32xbf16> to vector<32x32xbf16>
    %cst_33 = arith.constant dense<0.000000e+00> : vector<32x128xf32>
    %77 = tpu.matmul %76, %74, %cst_33 {dimension_numbers = #tpu.dot_dimension_numbers<[1], [0], [0], [1], [0, 0, 1, 1], [], []>} : vector<32x32xbf16>, vector<32x128xbf16>, vector<32x128xf32> -> vector<32x128xf32>
    %c1_i32_34 = arith.constant 1 : i32
    %78 = tpu.dynamic_rotate %69 by %c1_i32_34 dim 1 : vector<32x128xf32>, i32 -> vector<32x128xf32>
    %cst_35 = arith.constant 0.000000e+00 : f32
    %79 = vector.shape_cast %26 : vector<1x128xi1> to vector<1x128xi1>
    %80 = vector.broadcast %79 : vector<1x128xi1> to vector<32x128xi1>
    %81 = vector.broadcast %cst_35 : f32 to vector<32x128xf32>
    %82 = arith.select %80, %78, %81 : vector<32x128xi1>, vector<32x128xf32>
    %83 = arith.truncf %82 : vector<32x128xf32> to vector<32x128xbf16>
    %84 = vector.extract_strided_slice %71 {offsets = [0, 0, 0], sizes = [1, 32, 32], strides = [1, 1, 1]} : vector<3x32x32xbf16> to vector<1x32x32xbf16>
    %85 = vector.shape_cast %84 : vector<1x32x32xbf16> to vector<32x32xbf16>
    %cst_36 = arith.constant dense<0.000000e+00> : vector<32x128xf32>
    %86 = tpu.matmul %85, %83, %cst_36 {dimension_numbers = #tpu.dot_dimension_numbers<[1], [0], [0], [1], [0, 0, 1, 1], [], []>} : vector<32x32xbf16>, vector<32x128xbf16>, vector<32x128xf32> -> vector<32x128xf32>
    %87 = arith.addf %77, %86 : vector<32x128xf32>
    %c127_i32_37 = arith.constant 127 : i32
    %88 = tpu.dynamic_rotate %69 by %c127_i32_37 dim 1 : vector<32x128xf32>, i32 -> vector<32x128xf32>
    %cst_38 = arith.constant 0.000000e+00 : f32
    %89 = vector.shape_cast %35 : vector<1x128xi1> to vector<1x128xi1>
    %90 = vector.broadcast %89 : vector<1x128xi1> to vector<32x128xi1>
    %91 = vector.broadcast %cst_38 : f32 to vector<32x128xf32>
    %92 = arith.select %90, %88, %91 : vector<32x128xi1>, vector<32x128xf32>
    %93 = arith.truncf %92 : vector<32x128xf32> to vector<32x128xbf16>
    %94 = vector.extract_strided_slice %71 {offsets = [2, 0, 0], sizes = [1, 32, 32], strides = [1, 1, 1]} : vector<3x32x32xbf16> to vector<1x32x32xbf16>
    %95 = vector.shape_cast %94 : vector<1x32x32xbf16> to vector<32x32xbf16>
    %cst_39 = arith.constant dense<0.000000e+00> : vector<32x128xf32>
    %96 = tpu.matmul %95, %93, %cst_39 {dimension_numbers = #tpu.dot_dimension_numbers<[1], [0], [0], [1], [0, 0, 1, 1], [], []>} : vector<32x32xbf16>, vector<32x128xbf16>, vector<32x128xf32> -> vector<32x128xf32>
    %97 = arith.addf %87, %96 : vector<32x128xf32>
    %98 = vector.broadcast %73 : vector<32x1xf32> to vector<32x128xf32>
    %99 = arith.addf %97, %98 : vector<32x128xf32>
    %c1 = arith.constant 1 : index
    %c0_40 = arith.constant 0 : index
    %c0_41 = arith.constant 0 : index
    %c0_42 = arith.constant 0 : index
    %100 = vector.load %arg6[%c1, %c0_40, %c0_41, %c0_42] : memref<4x3x32x32xbf16, #tpu.memory_space<vmem>>, vector<1x3x32x32xbf16>
    %101 = vector.shape_cast %100 : vector<1x3x32x32xbf16> to vector<3x32x32xbf16>
    %c1_43 = arith.constant 1 : index
    %c0_44 = arith.constant 0 : index
    %c0_45 = arith.constant 0 : index
    %102 = vector.load %arg7[%c1_43, %c0_44, %c0_45] : memref<4x32x1xf32, #tpu.memory_space<vmem>>, vector<1x32x1xf32>
    %103 = vector.shape_cast %102 : vector<1x32x1xf32> to vector<32x1xf32>
    %104 = arith.truncf %99 : vector<32x128xf32> to vector<32x128xbf16>
    %105 = vector.extract_strided_slice %101 {offsets = [1, 0, 0], sizes = [1, 32, 32], strides = [1, 1, 1]} : vector<3x32x32xbf16> to vector<1x32x32xbf16>
    %106 = vector.shape_cast %105 : vector<1x32x32xbf16> to vector<32x32xbf16>
    %cst_46 = arith.constant dense<0.000000e+00> : vector<32x128xf32>
    %107 = tpu.matmul %106, %104, %cst_46 {dimension_numbers = #tpu.dot_dimension_numbers<[1], [0], [0], [1], [0, 0, 1, 1], [], []>} : vector<32x32xbf16>, vector<32x128xbf16>, vector<32x128xf32> -> vector<32x128xf32>
    %c1_i32_47 = arith.constant 1 : i32
    %108 = tpu.dynamic_rotate %99 by %c1_i32_47 dim 1 : vector<32x128xf32>, i32 -> vector<32x128xf32>
    %cst_48 = arith.constant 0.000000e+00 : f32
    %109 = vector.shape_cast %26 : vector<1x128xi1> to vector<1x128xi1>
    %110 = vector.broadcast %109 : vector<1x128xi1> to vector<32x128xi1>
    %111 = vector.broadcast %cst_48 : f32 to vector<32x128xf32>
    %112 = arith.select %110, %108, %111 : vector<32x128xi1>, vector<32x128xf32>
    %113 = arith.truncf %112 : vector<32x128xf32> to vector<32x128xbf16>
    %114 = vector.extract_strided_slice %101 {offsets = [0, 0, 0], sizes = [1, 32, 32], strides = [1, 1, 1]} : vector<3x32x32xbf16> to vector<1x32x32xbf16>
    %115 = vector.shape_cast %114 : vector<1x32x32xbf16> to vector<32x32xbf16>
    %cst_49 = arith.constant dense<0.000000e+00> : vector<32x128xf32>
    %116 = tpu.matmul %115, %113, %cst_49 {dimension_numbers = #tpu.dot_dimension_numbers<[1], [0], [0], [1], [0, 0, 1, 1], [], []>} : vector<32x32xbf16>, vector<32x128xbf16>, vector<32x128xf32> -> vector<32x128xf32>
    %117 = arith.addf %107, %116 : vector<32x128xf32>
    %c127_i32_50 = arith.constant 127 : i32
    %118 = tpu.dynamic_rotate %99 by %c127_i32_50 dim 1 : vector<32x128xf32>, i32 -> vector<32x128xf32>
    %cst_51 = arith.constant 0.000000e+00 : f32
    %119 = vector.shape_cast %35 : vector<1x128xi1> to vector<1x128xi1>
    %120 = vector.broadcast %119 : vector<1x128xi1> to vector<32x128xi1>
    %121 = vector.broadcast %cst_51 : f32 to vector<32x128xf32>
    %122 = arith.select %120, %118, %121 : vector<32x128xi1>, vector<32x128xf32>
    %123 = arith.truncf %122 : vector<32x128xf32> to vector<32x128xbf16>
    %124 = vector.extract_strided_slice %101 {offsets = [2, 0, 0], sizes = [1, 32, 32], strides = [1, 1, 1]} : vector<3x32x32xbf16> to vector<1x32x32xbf16>
    %125 = vector.shape_cast %124 : vector<1x32x32xbf16> to vector<32x32xbf16>
    %cst_52 = arith.constant dense<0.000000e+00> : vector<32x128xf32>
    %126 = tpu.matmul %125, %123, %cst_52 {dimension_numbers = #tpu.dot_dimension_numbers<[1], [0], [0], [1], [0, 0, 1, 1], [], []>} : vector<32x32xbf16>, vector<32x128xbf16>, vector<32x128xf32> -> vector<32x128xf32>
    %127 = arith.addf %117, %126 : vector<32x128xf32>
    %128 = vector.broadcast %103 : vector<32x1xf32> to vector<32x128xf32>
    %129 = arith.addf %127, %128 : vector<32x128xf32>
    %c2 = arith.constant 2 : index
    %c0_53 = arith.constant 0 : index
    %c0_54 = arith.constant 0 : index
    %c0_55 = arith.constant 0 : index
    %130 = vector.load %arg6[%c2, %c0_53, %c0_54, %c0_55] : memref<4x3x32x32xbf16, #tpu.memory_space<vmem>>, vector<1x3x32x32xbf16>
    %131 = vector.shape_cast %130 : vector<1x3x32x32xbf16> to vector<3x32x32xbf16>
    %c2_56 = arith.constant 2 : index
    %c0_57 = arith.constant 0 : index
    %c0_58 = arith.constant 0 : index
    %132 = vector.load %arg7[%c2_56, %c0_57, %c0_58] : memref<4x32x1xf32, #tpu.memory_space<vmem>>, vector<1x32x1xf32>
    %133 = vector.shape_cast %132 : vector<1x32x1xf32> to vector<32x1xf32>
    %134 = arith.truncf %129 : vector<32x128xf32> to vector<32x128xbf16>
    %135 = vector.extract_strided_slice %131 {offsets = [1, 0, 0], sizes = [1, 32, 32], strides = [1, 1, 1]} : vector<3x32x32xbf16> to vector<1x32x32xbf16>
    %136 = vector.shape_cast %135 : vector<1x32x32xbf16> to vector<32x32xbf16>
    %cst_59 = arith.constant dense<0.000000e+00> : vector<32x128xf32>
    %137 = tpu.matmul %136, %134, %cst_59 {dimension_numbers = #tpu.dot_dimension_numbers<[1], [0], [0], [1], [0, 0, 1, 1], [], []>} : vector<32x32xbf16>, vector<32x128xbf16>, vector<32x128xf32> -> vector<32x128xf32>
    %c1_i32_60 = arith.constant 1 : i32
    %138 = tpu.dynamic_rotate %129 by %c1_i32_60 dim 1 : vector<32x128xf32>, i32 -> vector<32x128xf32>
    %cst_61 = arith.constant 0.000000e+00 : f32
    %139 = vector.shape_cast %26 : vector<1x128xi1> to vector<1x128xi1>
    %140 = vector.broadcast %139 : vector<1x128xi1> to vector<32x128xi1>
    %141 = vector.broadcast %cst_61 : f32 to vector<32x128xf32>
    %142 = arith.select %140, %138, %141 : vector<32x128xi1>, vector<32x128xf32>
    %143 = arith.truncf %142 : vector<32x128xf32> to vector<32x128xbf16>
    %144 = vector.extract_strided_slice %131 {offsets = [0, 0, 0], sizes = [1, 32, 32], strides = [1, 1, 1]} : vector<3x32x32xbf16> to vector<1x32x32xbf16>
    %145 = vector.shape_cast %144 : vector<1x32x32xbf16> to vector<32x32xbf16>
    %cst_62 = arith.constant dense<0.000000e+00> : vector<32x128xf32>
    %146 = tpu.matmul %145, %143, %cst_62 {dimension_numbers = #tpu.dot_dimension_numbers<[1], [0], [0], [1], [0, 0, 1, 1], [], []>} : vector<32x32xbf16>, vector<32x128xbf16>, vector<32x128xf32> -> vector<32x128xf32>
    %147 = arith.addf %137, %146 : vector<32x128xf32>
    %c127_i32_63 = arith.constant 127 : i32
    %148 = tpu.dynamic_rotate %129 by %c127_i32_63 dim 1 : vector<32x128xf32>, i32 -> vector<32x128xf32>
    %cst_64 = arith.constant 0.000000e+00 : f32
    %149 = vector.shape_cast %35 : vector<1x128xi1> to vector<1x128xi1>
    %150 = vector.broadcast %149 : vector<1x128xi1> to vector<32x128xi1>
    %151 = vector.broadcast %cst_64 : f32 to vector<32x128xf32>
    %152 = arith.select %150, %148, %151 : vector<32x128xi1>, vector<32x128xf32>
    %153 = arith.truncf %152 : vector<32x128xf32> to vector<32x128xbf16>
    %154 = vector.extract_strided_slice %131 {offsets = [2, 0, 0], sizes = [1, 32, 32], strides = [1, 1, 1]} : vector<3x32x32xbf16> to vector<1x32x32xbf16>
    %155 = vector.shape_cast %154 : vector<1x32x32xbf16> to vector<32x32xbf16>
    %cst_65 = arith.constant dense<0.000000e+00> : vector<32x128xf32>
    %156 = tpu.matmul %155, %153, %cst_65 {dimension_numbers = #tpu.dot_dimension_numbers<[1], [0], [0], [1], [0, 0, 1, 1], [], []>} : vector<32x32xbf16>, vector<32x128xbf16>, vector<32x128xf32> -> vector<32x128xf32>
    %157 = arith.addf %147, %156 : vector<32x128xf32>
    %158 = vector.broadcast %133 : vector<32x1xf32> to vector<32x128xf32>
    %159 = arith.addf %157, %158 : vector<32x128xf32>
    %c3 = arith.constant 3 : index
    %c0_66 = arith.constant 0 : index
    %c0_67 = arith.constant 0 : index
    %c0_68 = arith.constant 0 : index
    %160 = vector.load %arg6[%c3, %c0_66, %c0_67, %c0_68] : memref<4x3x32x32xbf16, #tpu.memory_space<vmem>>, vector<1x3x32x32xbf16>
    %161 = vector.shape_cast %160 : vector<1x3x32x32xbf16> to vector<3x32x32xbf16>
    %c3_69 = arith.constant 3 : index
    %c0_70 = arith.constant 0 : index
    %c0_71 = arith.constant 0 : index
    %162 = vector.load %arg7[%c3_69, %c0_70, %c0_71] : memref<4x32x1xf32, #tpu.memory_space<vmem>>, vector<1x32x1xf32>
    %163 = vector.shape_cast %162 : vector<1x32x1xf32> to vector<32x1xf32>
    %164 = arith.truncf %159 : vector<32x128xf32> to vector<32x128xbf16>
    %165 = vector.extract_strided_slice %161 {offsets = [1, 0, 0], sizes = [1, 32, 32], strides = [1, 1, 1]} : vector<3x32x32xbf16> to vector<1x32x32xbf16>
    %166 = vector.shape_cast %165 : vector<1x32x32xbf16> to vector<32x32xbf16>
    %cst_72 = arith.constant dense<0.000000e+00> : vector<32x128xf32>
    %167 = tpu.matmul %166, %164, %cst_72 {dimension_numbers = #tpu.dot_dimension_numbers<[1], [0], [0], [1], [0, 0, 1, 1], [], []>} : vector<32x32xbf16>, vector<32x128xbf16>, vector<32x128xf32> -> vector<32x128xf32>
    %c1_i32_73 = arith.constant 1 : i32
    %168 = tpu.dynamic_rotate %159 by %c1_i32_73 dim 1 : vector<32x128xf32>, i32 -> vector<32x128xf32>
    %cst_74 = arith.constant 0.000000e+00 : f32
    %169 = vector.shape_cast %26 : vector<1x128xi1> to vector<1x128xi1>
    %170 = vector.broadcast %169 : vector<1x128xi1> to vector<32x128xi1>
    %171 = vector.broadcast %cst_74 : f32 to vector<32x128xf32>
    %172 = arith.select %170, %168, %171 : vector<32x128xi1>, vector<32x128xf32>
    %173 = arith.truncf %172 : vector<32x128xf32> to vector<32x128xbf16>
    %174 = vector.extract_strided_slice %161 {offsets = [0, 0, 0], sizes = [1, 32, 32], strides = [1, 1, 1]} : vector<3x32x32xbf16> to vector<1x32x32xbf16>
    %175 = vector.shape_cast %174 : vector<1x32x32xbf16> to vector<32x32xbf16>
    %cst_75 = arith.constant dense<0.000000e+00> : vector<32x128xf32>
    %176 = tpu.matmul %175, %173, %cst_75 {dimension_numbers = #tpu.dot_dimension_numbers<[1], [0], [0], [1], [0, 0, 1, 1], [], []>} : vector<32x32xbf16>, vector<32x128xbf16>, vector<32x128xf32> -> vector<32x128xf32>
    %177 = arith.addf %167, %176 : vector<32x128xf32>
    %c127_i32_76 = arith.constant 127 : i32
    %178 = tpu.dynamic_rotate %159 by %c127_i32_76 dim 1 : vector<32x128xf32>, i32 -> vector<32x128xf32>
    %cst_77 = arith.constant 0.000000e+00 : f32
    %179 = vector.shape_cast %35 : vector<1x128xi1> to vector<1x128xi1>
    %180 = vector.broadcast %179 : vector<1x128xi1> to vector<32x128xi1>
    %181 = vector.broadcast %cst_77 : f32 to vector<32x128xf32>
    %182 = arith.select %180, %178, %181 : vector<32x128xi1>, vector<32x128xf32>
    %183 = arith.truncf %182 : vector<32x128xf32> to vector<32x128xbf16>
    %184 = vector.extract_strided_slice %161 {offsets = [2, 0, 0], sizes = [1, 32, 32], strides = [1, 1, 1]} : vector<3x32x32xbf16> to vector<1x32x32xbf16>
    %185 = vector.shape_cast %184 : vector<1x32x32xbf16> to vector<32x32xbf16>
    %cst_78 = arith.constant dense<0.000000e+00> : vector<32x128xf32>
    %186 = tpu.matmul %185, %183, %cst_78 {dimension_numbers = #tpu.dot_dimension_numbers<[1], [0], [0], [1], [0, 0, 1, 1], [], []>} : vector<32x32xbf16>, vector<32x128xbf16>, vector<32x128xf32> -> vector<32x128xf32>
    %187 = arith.addf %177, %186 : vector<32x128xf32>
    %188 = vector.broadcast %163 : vector<32x1xf32> to vector<32x128xf32>
    %189 = arith.addf %187, %188 : vector<32x128xf32>
    %190 = arith.addf %189, %41 : vector<32x128xf32>
    %cst_79 = arith.constant 0.000000e+00 : f32
    %191 = vector.broadcast %cst_79 : f32 to vector<32x128xf32>
    %192 = arith.maximumf %190, %191 : vector<32x128xf32>
    %c0_80 = arith.constant 0 : index
    %c0_81 = arith.constant 0 : index
    %193 = vector.load %arg8[%c0_80, %c0_81] : memref<32x128xf32, #tpu.memory_space<vmem>>, vector<32x128xf32>
    tpu.vector_store %arg8[%c0_80, %c0_81], %192 {strides = array<i32>} : memref<32x128xf32, #tpu.memory_space<vmem>>, vector<32x128xf32>,
    return
  }
  func.func @transform_0(%arg0: i32) -> (i32, i32) {
    %c0_i32 = arith.constant 0 : i32
    %c0_i32_0 = arith.constant 0 : i32
    return %c0_i32, %arg0 : i32, i32
  }
  func.func @transform_1(%arg0: i32) -> (i32, i32) {
    %c0_i32 = arith.constant 0 : i32
    %c0_i32_0 = arith.constant 0 : i32
    %c0_i32_1 = arith.constant 0 : i32
    return %c0_i32, %c0_i32_0 : i32, i32
  }
  func.func @transform_2(%arg0: i32) -> (i32, i32) {
    %c0_i32 = arith.constant 0 : i32
    %c0_i32_0 = arith.constant 0 : i32
    %c0_i32_1 = arith.constant 0 : i32
    return %c0_i32, %c0_i32_0 : i32, i32
  }
  func.func @transform_3(%arg0: i32) -> (i32, i32, i32) {
    %c0_i32 = arith.constant 0 : i32
    %c0_i32_0 = arith.constant 0 : i32
    %c0_i32_1 = arith.constant 0 : i32
    %c0_i32_2 = arith.constant 0 : i32
    return %c0_i32, %c0_i32_0, %c0_i32_1 : i32, i32, i32
  }
  func.func @transform_4(%arg0: i32) -> (i32, i32) {
    %c0_i32 = arith.constant 0 : i32
    %c0_i32_0 = arith.constant 0 : i32
    %c0_i32_1 = arith.constant 0 : i32
    return %c0_i32, %c0_i32_0 : i32, i32
  }
  func.func @transform_5(%arg0: i32) -> (i32, i32, i32, i32) {
    %c0_i32 = arith.constant 0 : i32
    %c0_i32_0 = arith.constant 0 : i32
    %c0_i32_1 = arith.constant 0 : i32
    %c0_i32_2 = arith.constant 0 : i32
    %c0_i32_3 = arith.constant 0 : i32
    return %c0_i32, %c0_i32_0, %c0_i32_1, %c0_i32_2 : i32, i32, i32, i32
  }
  func.func @transform_6(%arg0: i32) -> (i32, i32, i32) {
    %c0_i32 = arith.constant 0 : i32
    %c0_i32_0 = arith.constant 0 : i32
    %c0_i32_1 = arith.constant 0 : i32
    %c0_i32_2 = arith.constant 0 : i32
    return %c0_i32, %c0_i32_0, %c0_i32_1 : i32, i32, i32
  }
  func.func @transform_7(%arg0: i32) -> (i32, i32) {
    %c0_i32 = arith.constant 0 : i32
    %c0_i32_0 = arith.constant 0 : i32
    return %c0_i32, %arg0 : i32, i32
  }
}

</mosaic_0001>

<llo_original>
// kernel: tpu_custom_call.1
$region0: #{tpu_custom_call.1}
  #allocation0 [shape = 'u32[]', space=smem, size = 0x4, offset = 0x4, fixed_abs, tag = 'smem constant byte address 0x4 - core index']
  #allocation1 [shape = 'u32[72,128]{1,0:T(1,128)}', space=vmem, size = 0x9000, scoped, tag = 'internal scratch']
  %s0 = inlined_call_operand.vmem [shape: f32[16,256], index: 0, kind: input, shape index: {}]
  %s1 = inlined_call_operand.vmem [shape: bf16[32,16], index: 1, kind: input, shape index: {}]
  %s2 = inlined_call_operand.vmem [shape: f32[32,1], index: 2, kind: input, shape index: {}]
  %s3 = inlined_call_operand.vmem [shape: bf16[3,32,16], index: 3, kind: input, shape index: {}]
  %s4 = inlined_call_operand.vmem [shape: f32[32,1], index: 4, kind: input, shape index: {}]
  %s5 = inlined_call_operand.vmem [shape: bf16[4,3,32,32], index: 5, kind: input, shape index: {}]
  %s6 = inlined_call_operand.vmem [shape: f32[4,32,1], index: 6, kind: input, shape index: {}]
  %s7 = inlined_call_operand.hbm [shape: f32[32,256], index: 7, kind: output, shape index: {}]
  %s8 = sld [smem:[#allocation0]]
  $region99: #{tpu_custom_call.1} parent=0
    _
  %s10 = ssub.s32 1, %s8
  %s11 = scalar_select 0, %s10, %s8
  $region1: #{tpu_custom_call.1} parent=0
    #allocation2 [shape = 'u8[16384]{0}', space=vmem, size = 0x4000, scoped, tag = 'input window, operand 0']
    #allocation3 [shape = 'u8[32768]{0}', space=vmem, size = 0x8000, scoped, tag = 'output window, operand 0']
    #allocation4 [shape = 's32[2]{0}', space=sflag, size = 0x8, scoped, tag = 'scoped memory for tpu_custom_call.1']
    %12 = vsyncpa [#allocation4], 0
    %s13 = scalar_lea.sflag [#allocation4], 1
    %14 = vsyncpa %s13, 0
    loop: start=0, step=1, limit=4
    $region2: #{tpu_custom_call.1} parent=1 // loop_pre_header
      _
    $region3: #{tpu_custom_call.1} parent=1 // loop_header
      %s16 = sphi 0, %s20
      %p17 = scmp.ge.s32.totalorder %s16, 4
      %s26 = sphi 0, %s28
      %s29 = sphi 0, %s26
      %s30 = sphi 0, %s29
      %s46 = sphi 0, %s30
      %s50 = sphi 0, %s50
      %s52 = sphi 0, %s50
      %s53 = sphi 0, %s52
      %s67 = sphi 0, %s53
      %s71 = sphi 0, %s71
      %s73 = sphi 0, %s71
      %s74 = sphi 0, %s73
      %s88 = sphi 0, %s74
      %s92 = sphi 0, %s92
      %s94 = sphi 0, %s92
      %s95 = sphi 0, %s94
      %s109 = sphi 0, %s95
      %s113 = sphi 0, %s113
      %s115 = sphi 0, %s113
      %s116 = sphi 0, %s115
      %s130 = sphi 0, %s116
      %s134 = sphi 0, %s134
      %s136 = sphi 0, %s134
      %s137 = sphi 0, %s136
      %s151 = sphi 0, %s137
      %s155 = sphi 0, %s155
      %s157 = sphi 0, %s155
      %s158 = sphi 0, %s157
      %s172 = sphi 0, %s158
      %s178 = sphi 0, %s180
      %s181 = sphi 0, %s178
      %s182 = sphi 0, %s181
      %s198 = sphi 0, %s182
    $region4: #{tpu_custom_call.1} parent=1 // loop_header_branch
      %19 = sbr.rel (%p17) target = $region8
    $region5: #{tpu_custom_call.1} parent=1 // loop_body
      %s21 = ssub.s32 %s16, 1
      %s22 = ssub.s32 %s16, 2
      %s23 = sadd.s32 %s16, 1
      %s24 = ssub.s32 %s16, %s23
      %p25 = scmp.eq.s32.totalorder %s24, 0
      %s27 = sadd.s32 %s26, 1
      %s28 = scalar_select %p25, %s26, %s27
      %p31 = pneg %p25
      %p32 = scmp.eq.s32.totalorder %s16, 1
      %p33 = por %p31, %p32
      %p34 = scmp.ne.s32.totalorder %s26, %s29
      %p35 = scmp.eq.s32.totalorder %s16, 0
      %p36 = por %p34, %p35
      %p37 = scmp.ne.s32.totalorder %s26, %s29
      %p38 = scmp.eq.s32.totalorder %s21, 1
      %p39 = por %p37, %p38
      %p40 = scmp.ne.s32.totalorder %s29, %s30
      %p41 = scmp.eq.s32.totalorder %s21, 0
      %p42 = por %p40, %p41
      %p43 = scmp.ne.s32.totalorder %s29, %s30
      %p44 = scmp.eq.s32.totalorder %s22, 1
      %p45 = por %p43, %p44
      %p47 = scmp.ne.s32.totalorder %s30, %s46
      %p48 = scmp.eq.s32.totalorder %s22, 0
      %p49 = por %p47, %p48
      %s51 = sadd.s32 %s50, 1
      %p54 = scmp.eq.s32.totalorder %s16, 1
      %p55 = scmp.ne.s32.totalorder %s50, %s52
      %p56 = scmp.eq.s32.totalorder %s16, 0
      %p57 = por %p55, %p56
      %p58 = scmp.ne.s32.totalorder %s50, %s52
      %p59 = scmp.eq.s32.totalorder %s21, 1
      %p60 = por %p58, %p59
      %p61 = scmp.ne.s32.totalorder %s52, %s53
      %p62 = scmp.eq.s32.totalorder %s21, 0
      %p63 = por %p61, %p62
      %p64 = scmp.ne.s32.totalorder %s52, %s53
      %p65 = scmp.eq.s32.totalorder %s22, 1
      %p66 = por %p64, %p65
      %p68 = scmp.ne.s32.totalorder %s53, %s67
      %p69 = scmp.eq.s32.totalorder %s22, 0
      %p70 = por %p68, %p69
      %s72 = sadd.s32 %s71, 1
      %p75 = scmp.eq.s32.totalorder %s16, 1
      %p76 = scmp.ne.s32.totalorder %s71, %s73
      %p77 = scmp.eq.s32.totalorder %s16, 0
      %p78 = por %p76, %p77
      %p79 = scmp.ne.s32.totalorder %s71, %s73
      %p80 = scmp.eq.s32.totalorder %s21, 1
      %p81 = por %p79, %p80
      %p82 = scmp.ne.s32.totalorder %s73, %s74
      %p83 = scmp.eq.s32.totalorder %s21, 0
      %p84 = por %p82, %p83
      %p85 = scmp.ne.s32.totalorder %s73, %s74
      %p86 = scmp.eq.s32.totalorder %s22, 1
      %p87 = por %p85, %p86
      %p89 = scmp.ne.s32.totalorder %s74, %s88
      %p90 = scmp.eq.s32.totalorder %s22, 0
      %p91 = por %p89, %p90
      %s93 = sadd.s32 %s92, 1
      %p96 = scmp.eq.s32.totalorder %s16, 1
      %p97 = scmp.ne.s32.totalorder %s92, %s94
      %p98 = scmp.eq.s32.totalorder %s16, 0
      %p99 = por %p97, %p98
      %p100 = scmp.ne.s32.totalorder %s92, %s94
      %p101 = scmp.eq.s32.totalorder %s21, 1
      %p102 = por %p100, %p101
      %p103 = scmp.ne.s32.totalorder %s94, %s95
      %p104 = scmp.eq.s32.totalorder %s21, 0
      %p105 = por %p103, %p104
      %p106 = scmp.ne.s32.totalorder %s94, %s95
      %p107 = scmp.eq.s32.totalorder %s22, 1
      %p108 = por %p106, %p107
      %p110 = scmp.ne.s32.totalorder %s95, %s109
      %p111 = scmp.eq.s32.totalorder %s22, 0
      %p112 = por %p110, %p111
      %s114 = sadd.s32 %s113, 1
      %p117 = scmp.eq.s32.totalorder %s16, 1
      %p118 = scmp.ne.s32.totalorder %s113, %s115
      %p119 = scmp.eq.s32.totalorder %s16, 0
      %p120 = por %p118, %p119
      %p121 = scmp.ne.s32.totalorder %s113, %s115
      %p122 = scmp.eq.s32.totalorder %s21, 1
      %p123 = por %p121, %p122
      %p124 = scmp.ne.s32.totalorder %s115, %s116
      %p125 = scmp.eq.s32.totalorder %s21, 0
      %p126 = por %p124, %p125
      %p127 = scmp.ne.s32.totalorder %s115, %s116
      %p128 = scmp.eq.s32.totalorder %s22, 1
      %p129 = por %p127, %p128
      %p131 = scmp.ne.s32.totalorder %s116, %s130
      %p132 = scmp.eq.s32.totalorder %s22, 0
      %p133 = por %p131, %p132
      %s135 = sadd.s32 %s134, 1
      %p138 = scmp.eq.s32.totalorder %s16, 1
      %p139 = scmp.ne.s32.totalorder %s134, %s136
      %p140 = scmp.eq.s32.totalorder %s16, 0
      %p141 = por %p139, %p140
      %p142 = scmp.ne.s32.totalorder %s134, %s136
      %p143 = scmp.eq.s32.totalorder %s21, 1
      %p144 = por %p142, %p143
      %p145 = scmp.ne.s32.totalorder %s136, %s137
      %p146 = scmp.eq.s32.totalorder %s21, 0
      %p147 = por %p145, %p146
      %p148 = scmp.ne.s32.totalorder %s136, %s137
      %p149 = scmp.eq.s32.totalorder %s22, 1
      %p150 = por %p148, %p149
      %p152 = scmp.ne.s32.totalorder %s137, %s151
      %p153 = scmp.eq.s32.totalorder %s22, 0
      %p154 = por %p152, %p153
      %s156 = sadd.s32 %s155, 1
      %p159 = scmp.eq.s32.totalorder %s16, 1
      %p160 = scmp.ne.s32.totalorder %s155, %s157
      %p161 = scmp.eq.s32.totalorder %s16, 0
      %p162 = por %p160, %p161
      %p163 = scmp.ne.s32.totalorder %s155, %s157
      %p164 = scmp.eq.s32.totalorder %s21, 1
      %p165 = por %p163, %p164
      %p166 = scmp.ne.s32.totalorder %s157, %s158
      %p167 = scmp.eq.s32.totalorder %s21, 0
      %p168 = por %p166, %p167
      %p169 = scmp.ne.s32.totalorder %s157, %s158
      %p170 = scmp.eq.s32.totalorder %s22, 1
      %p171 = por %p169, %p170
      %p173 = scmp.ne.s32.totalorder %s158, %s172
      %p174 = scmp.eq.s32.totalorder %s22, 0
      %p175 = por %p173, %p174
      %s176 = ssub.s32 %s16, %s23
      %p177 = scmp.eq.s32.totalorder %s176, 0
      %s179 = sadd.s32 %s178, 1
      %s180 = scalar_select %p177, %s178, %s179
      %p183 = pneg %p177
      %p184 = scmp.eq.s32.totalorder %s16, 1
      %p185 = por %p183, %p184
      %p186 = scmp.ne.s32.totalorder %s178, %s181
      %p187 = scmp.eq.s32.totalorder %s16, 0
      %p188 = por %p186, %p187
      %p189 = scmp.ne.s32.totalorder %s178, %s181
      %p190 = scmp.eq.s32.totalorder %s21, 1
      %p191 = por %p189, %p190
      %p192 = scmp.ne.s32.totalorder %s181, %s182
      %p193 = scmp.eq.s32.totalorder %s21, 0
      %p194 = por %p192, %p193
      %p195 = scmp.ne.s32.totalorder %s181, %s182
      %p196 = scmp.eq.s32.totalorder %s22, 1
      %p197 = por %p195, %p196
      %p199 = scmp.ne.s32.totalorder %s182, %s198
      %p200 = scmp.eq.s32.totalorder %s22, 0
      %p201 = por %p199, %p200
      %p202 = scmp.le.s32.totalorder 1, %s16
      %p203 = scmp.lt.s32.totalorder %s16, 3
      %p204 = pnand %p202, %p203
      %p205 = pneg %p204
      // Predicated region
      $region9: #{tpu_custom_call.1} parent=5 // pred_check
        _
      $region10: #{tpu_custom_call.1} parent=5 // pred_check_branch
        %207 = sbr.rel (%p204) target = $region12
      $region11: #{tpu_custom_call.1} parent=5 // pred_region
        %s208 = ssub.s32 %s16, 1
        // Predicated region
        $region13: #{tpu_custom_call.1} parent=11 // pred_check
          %p209 = pneg %p63
        $region14: #{tpu_custom_call.1} parent=11 // pred_check_branch
          %211 = sbr.rel (%p209) target = $region16
        $region15: #{tpu_custom_call.1} parent=11 // pred_region
          _
        $region16: #{tpu_custom_call.1} parent=11 // pred_fallthru
          _
        // Predicated region
        $region17: #{tpu_custom_call.1} parent=11 // pred_check
          %p212 = pneg %p84
        $region18: #{tpu_custom_call.1} parent=11 // pred_check_branch
          %214 = sbr.rel (%p212) target = $region20
        $region19: #{tpu_custom_call.1} parent=11 // pred_region
          _
        $region20: #{tpu_custom_call.1} parent=11 // pred_fallthru
          _
        // Predicated region
        $region21: #{tpu_custom_call.1} parent=11 // pred_check
          %p215 = pneg %p105
        $region22: #{tpu_custom_call.1} parent=11 // pred_check_branch
          %217 = sbr.rel (%p215) target = $region24
        $region23: #{tpu_custom_call.1} parent=11 // pred_region
          _
        $region24: #{tpu_custom_call.1} parent=11 // pred_fallthru
          _
        // Predicated region
        $region25: #{tpu_custom_call.1} parent=11 // pred_check
          %p218 = pneg %p126
        $region26: #{tpu_custom_call.1} parent=11 // pred_check_branch
          %220 = sbr.rel (%p218) target = $region28
        $region27: #{tpu_custom_call.1} parent=11 // pred_region
          _
        $region28: #{tpu_custom_call.1} parent=11 // pred_fallthru
          _
        // Predicated region
        $region29: #{tpu_custom_call.1} parent=11 // pred_check
          %p221 = pneg %p147
        $region30: #{tpu_custom_call.1} parent=11 // pred_check_branch
          %223 = sbr.rel (%p221) target = $region32
        $region31: #{tpu_custom_call.1} parent=11 // pred_region
          _
        $region32: #{tpu_custom_call.1} parent=11 // pred_fallthru
          _
        // Predicated region
        $region33: #{tpu_custom_call.1} parent=11 // pred_check
          %p224 = pneg %p168
        $region34: #{tpu_custom_call.1} parent=11 // pred_check_branch
          %226 = sbr.rel (%p224) target = $region36
        $region35: #{tpu_custom_call.1} parent=11 // pred_region
          _
        $region36: #{tpu_custom_call.1} parent=11 // pred_fallthru
          _
      $region12: #{tpu_custom_call.1} parent=5 // pred_fallthru
        _
      %p227 = scmp.lt.s32.totalorder %s16, 2
      // Predicated region
      $region37: #{tpu_custom_call.1} parent=5 // pred_check
        %p228 = pneg %p227
      $region38: #{tpu_custom_call.1} parent=5 // pred_check_branch
        %230 = sbr.rel (%p228) target = $region40
      $region39: #{tpu_custom_call.1} parent=5 // pred_region
        // Predicated region
        $region41: #{tpu_custom_call.1} parent=39 // pred_check
          %p231 = pneg %p36
        $region42: #{tpu_custom_call.1} parent=39 // pred_check_branch
          %233 = sbr.rel (%p231) target = $region44
        $region43: #{tpu_custom_call.1} parent=39 // pred_region
          %s234 = sand.u32 %s26, 1
          %s235 = sand.u32 %s26, 1
          %s236 = smul.addr %s235, 16
          %s237 = scalar_lea.vmem [#allocation2], %s236
          %s238 = smul.addr %s16, 8
          %s239 = scalar_lea.vmem %s0, %s238
          // Predicated region
          $region45: #{tpu_custom_call.1} parent=43 // pred_check
            _
          $region46: #{tpu_custom_call.1} parent=43 // pred_check_branch
            %241 = sbr.rel (0) target = $region48
          $region47: #{tpu_custom_call.1} parent=43 // pred_region
            // Predicated region
            $region49: #{tpu_custom_call.1} parent=47 // pred_check
              _
            $region50: #{tpu_custom_call.1} parent=47 // pred_check_branch
              %243 = sbr.rel (0) target = $region52
            $region51: #{tpu_custom_call.1} parent=47 // pred_region
              // Predicated region
              $region64: #{tpu_custom_call.1} parent=51 // pred_check
                _
              $region65: #{tpu_custom_call.1} parent=51 // pred_check_branch
                %261 = sbr.rel (0) target = $region67
              $region66: #{tpu_custom_call.1} parent=51 // pred_region
                loop: start=0, step=1, limit=1
                $region68: #{tpu_custom_call.1} parent=66 // loop_pre_header
                  _
                $region69: #{tpu_custom_call.1} parent=66 // loop_header
                  %s263 = sphi 0, %s267
                  %p264 = scmp.ge.s32.totalorder %s263, 1
                  %s268 = sphi %s239, %s239
                  %s269 = sphi %s237, %s237
                $region70: #{tpu_custom_call.1} parent=66 // loop_header_branch
                  %266 = sbr.rel (%p264) target = $region74
                $region71: #{tpu_custom_call.1} parent=66 // loop_body
                  %v270 = vld [vmem:[%s268] sm:$0xff]
                  %271 = vst [vmem:[%s269] sm:$0xff] %v270
                  %v272 = vld [vmem:[%s268 + $0x10] sm:$0xff]
                  %273 = vst [vmem:[%s269 + $0x8] sm:$0xff] %v272
                $region72: #{tpu_custom_call.1} parent=66 // loop_footer
                  %s267 = sadd.s32 1, %s263
                $region73: #{tpu_custom_call.1} parent=66 // loop_footer_branch
                  %262 = sbr.rel target = $region69
                $region74: #{tpu_custom_call.1} parent=66 // loop_exit
                  _
              $region67: #{tpu_custom_call.1} parent=51 // pred_fallthru
                _
              // Predicated region
              $region75: #{tpu_custom_call.1} parent=51 // pred_check
                _
              $region76: #{tpu_custom_call.1} parent=51 // pred_check_branch
                %275 = sbr.rel target = $region78
              $region77: #{tpu_custom_call.1} parent=51 // pred_region
                _
              $region78: #{tpu_custom_call.1} parent=51 // pred_fallthru
                _
            $region52: #{tpu_custom_call.1} parent=47 // pred_fallthru
              _
            // Predicated region
            $region53: #{tpu_custom_call.1} parent=47 // pred_check
              _
            $region54: #{tpu_custom_call.1} parent=47 // pred_check_branch
              %245 = sbr.rel target = $region56
            $region55: #{tpu_custom_call.1} parent=47 // pred_region
              %s247 = ssub.s32 256, 1
              loop: start=0, step=1, limit=1
              $region57: #{tpu_custom_call.1} parent=55 // loop_pre_header
                _
              $region58: #{tpu_custom_call.1} parent=55 // loop_header
                %s249 = sphi 0, %s253
                %p250 = scmp.ge.s32.totalorder %s249, 1
                %s254 = sphi %s239, %s239
                %s255 = sphi %s237, %s237
              $region59: #{tpu_custom_call.1} parent=55 // loop_header_branch
                %252 = sbr.rel (%p250) target = $region63
              $region60: #{tpu_custom_call.1} parent=55 // loop_body
                %v256 = vld [vmem:[%s254] sm:%s247]
                %257 = vst [vmem:[%s255] sm:%s247] %v256
                %v258 = vld [vmem:[%s254 + $0x10] sm:%s247]
                %259 = vst [vmem:[%s255 + $0x8] sm:%s247] %v258
              $region61: #{tpu_custom_call.1} parent=55 // loop_footer
                %s253 = sadd.s32 1, %s249
              $region62: #{tpu_custom_call.1} parent=55 // loop_footer_branch
                %248 = sbr.rel target = $region58
              $region63: #{tpu_custom_call.1} parent=55 // loop_exit
                _
            $region56: #{tpu_custom_call.1} parent=47 // pred_fallthru
              _
          $region48: #{tpu_custom_call.1} parent=43 // pred_fallthru
            _
          %276 = vnop
        $region44: #{tpu_custom_call.1} parent=39 // pred_fallthru
          _
      $region40: #{tpu_custom_call.1} parent=5 // pred_fallthru
        _
      %p277 = scmp.le.s32.totalorder 1, %s16
      %p278 = scmp.lt.s32.totalorder %s16, 3
      %p279 = pnand %p277, %p278
      %p280 = pneg %p279
      // Predicated region
      $region79: #{tpu_custom_call.1} parent=5 // pred_check
        _
      $region80: #{tpu_custom_call.1} parent=5 // pred_check_branch
        %282 = sbr.rel (%p279) target = $region82
      $region81: #{tpu_custom_call.1} parent=5 // pred_region
        %s283 = ssub.s32 %s16, 1
        %s284 = sand.u32 %s29, 1
        %s285 = sand.u32 %s29, 1
        %s286 = smul.addr %s285, 16
        %s287 = scalar_lea.vmem [#allocation2], %s286
        // Predicated region
        $region83: #{tpu_custom_call.1} parent=81 // pred_check
          %p288 = pneg %p42
        $region84: #{tpu_custom_call.1} parent=81 // pred_check_branch
          %290 = sbr.rel (%p288) target = $region86
        $region85: #{tpu_custom_call.1} parent=81 // pred_region
          _
        $region86: #{tpu_custom_call.1} parent=81 // pred_fallthru
          _
        %s291 = sand.u32 %s29, 1
        %s292 = sand.u32 %s29, 1
        %s293 = smul.addr %s292, 16
        %s294 = scalar_lea.vmem [#allocation2], %s293
        %p295 = pneg %p42
        %p296 = pneg %p39
        %p297 = pneg %p63
        %p298 = pneg %p60
        %p299 = pneg %p84
        %p300 = pneg %p81
        %p301 = pneg %p105
        %p302 = pneg %p102
        %p303 = pneg %p126
        %p304 = pneg %p123
        %p305 = pneg %p147
        %p306 = pneg %p144
        %p307 = pneg %p168
        %p308 = pneg %p165
        %p309 = pneg %p194
        %p310 = pneg %p191
        %s311 = sand.u32 %s181, 1
        %s312 = scalar_lea.sflag [#allocation4], %s311
        %s313 = sand.u32 %s181, 1
        %s314 = smul.addr %s313, 32
        %s315 = scalar_lea.vmem [#allocation3], %s314
        %v317 = vld [vmem:[%s287] sm:$0xff]
        %v318 = vld [vmem:[%s287 + $0x8] sm:$0xff]
        %v319 = vlaneseq
        %v320 = vand.u32 %v319, 127
        %vm321 = vcmp.lt.s32.totalorder %v320, 0
        %v322 = vsub.s32 0, %v320
        %v323 = vsel %vm321, %v322, %v320
        %v324 = vshrl.u32 %v323, 7
        %v325 = vand.u32 %v323, 127
        %v326 = vsub.s32 0, %v325
        %v327 = vsel %vm321, %v326, %v325
        %vm328 = vcmp.ne.s32.totalorder %v327, 0
        %vm329 = vcmp.lt.s32.totalorder %v327, 0
        %vm330 = vmand %vm329, %vm328
        %v331 = vadd.s32 %v327, 128
        %v332 = vsel %vm330, %v331, %v327
        %v333 = vadd.s32 %v332, 4294967295
        %vm334 = vcmp.ge.s32.totalorder %v333, 0
        %vm335 = vcmp.lt.s32.totalorder %v333, 128
        %vm336 = vmand %vm334, %vm335
        %v337 = vadd.s32 %v332, 1
        %vm338 = vcmp.ge.s32.totalorder %v337, 0
        %vm339 = vcmp.lt.s32.totalorder %v337, 128
        %vm340 = vmand %vm338, %vm339
        %v341 = vld [vmem:[%s1] sm:$0xf]
        %v342 = vld [vmem:[%s1 + $0x4] sm:$0xf]
        %v343 = vld [vmem:[%s1 + $0x8] sm:$0xf]
        %v344 = vld [vmem:[%s1 + $0xc] sm:$0xf]
        %v345 = vpack.c.bf16 %v318, %v317
        %v346 = vld [vmem:[%s2] sm:$0xff]
        %v347 = vld [vmem:[%s2 + $0x8] sm:$0xff]
        %v348 = vld [vmem:[%s2 + $0x10] sm:$0xff]
        %v349 = vld [vmem:[%s2 + $0x18] sm:$0xff]
        %351 = vset.pattern.permute.xlu0 0
        %352 = vperm.xlu0 %351, %v346
        %v353 = vpop.permute.xlu0 %352
        %356 = vset.pattern.permute.xlu0 0
        %357 = vperm.xlu0 %356, %v347
        %v358 = vpop.permute.xlu0 %357
        %361 = vset.pattern.permute.xlu0 0
        %362 = vperm.xlu0 %361, %v348
        %v363 = vpop.permute.xlu0 %362
        %366 = vset.pattern.permute.xlu0 0
        %367 = vperm.xlu0 %366, %v349
        %v368 = vpop.permute.xlu0 %367
        %v374 = vunpack.c.l.b16 %v341
        %v375 = vunpack.c.l.b16 %v342
        %v376 = vunpack.c.l.b16 %v343
        %v377 = vunpack.c.l.b16 %v344
        %v378 = vpack.c.b16 %v375, %v374
        %v379 = vpack.c.b16 %v377, %v376
        %vm380 = vcmask 130048
        %v382 = vsel %vm380, %v378, 0
        %v385 = vsel %vm380, %v379, 0
        %387 = vmatpush.bf16.msra.mxu0 0
        %388 = vmatpush.bf16.msra.mxu0 0
        %389 = vmatpush.bf16.msra.mxu0 0
        %390 = vmatpush.bf16.msra.mxu0 0
        %391 = vmatpush.bf16.msra.mxu0 0
        %392 = vmatpush.bf16.msra.mxu0 0
        %393 = vmatpush.bf16.msra.mxu0 0
        %394 = vmatpush.bf16.msra.mxu0 %v345
        %395 = vmatmul.bf16.gmra.mxu0 %v382
        %v396 = vpop.f32.mrf.mxu0
        %v397 = vadd.f32 %v353, %v396
        %v398 = vpop.f32.mrf.mxu0
        %v399 = vadd.f32 %v358, %v398
        %400 = vmatmul.bf16.gmra.mxu0 %v385
        %v401 = vpop.f32.mrf.mxu0
        %v402 = vadd.f32 %v363, %v401
        %v403 = vpop.f32.mrf.mxu0
        %v404 = vadd.f32 %v368, %v403
        %405 = vdwg.mxu0
        %v406 = vld [vmem:[%s3] sm:$0xf]
        %v407 = vld [vmem:[%s3 + $0x4] sm:$0xf]
        %v408 = vld [vmem:[%s3 + $0x8] sm:$0xf]
        %v409 = vld [vmem:[%s3 + $0xc] sm:$0xf]
        %v410 = vld [vmem:[%s3 + $0x10] sm:$0xf]
        %v411 = vld [vmem:[%s3 + $0x14] sm:$0xf]
        %v412 = vld [vmem:[%s3 + $0x18] sm:$0xf]
        %v413 = vld [vmem:[%s3 + $0x1c] sm:$0xf]
        %v414 = vld [vmem:[%s3 + $0x20] sm:$0xf]
        %v415 = vld [vmem:[%s3 + $0x24] sm:$0xf]
        %v416 = vld [vmem:[%s3 + $0x28] sm:$0xf]
        %v417 = vld [vmem:[%s3 + $0x2c] sm:$0xf]
        %v418 = vld [vmem:[%s4] sm:$0xff]
        %v419 = vld [vmem:[%s4 + $0x8] sm:$0xff]
        %v420 = vld [vmem:[%s4 + $0x10] sm:$0xff]
        %v421 = vld [vmem:[%s4 + $0x18] sm:$0xff]
        %422 = vrot.lane.b32.xlu0 %v317, 1
        %v423 = vpop.permute.xlu0 %422
        %424 = vrot.lane.b32.xlu0 %v318, 1
        %v425 = vpop.permute.xlu0 %424
        %v426 = vsel %vm336, 1, 0
        %vm427 = vcmp.eq.s32.totalorder %v426, 1
        %v428 = vsel %vm427, %v423, 0.0
        %v429 = vsel %vm427, %v425, 0.0
        %v430 = vpack.c.bf16 %v429, %v428
        %v435 = vunpack.c.l.b16 %v406
        %v436 = vunpack.c.l.b16 %v407
        %v437 = vunpack.c.l.b16 %v408
        %v438 = vunpack.c.l.b16 %v409
        %v439 = vpack.c.b16 %v436, %v435
        %v440 = vpack.c.b16 %v438, %v437
        %v442 = vsel %vm380, %v439, 0
        %v445 = vsel %vm380, %v440, 0
        %447 = vmatpush.bf16.msra.mxu0 0
        %448 = vmatpush.bf16.msra.mxu0 0
        %449 = vmatpush.bf16.msra.mxu0 0
        %450 = vmatpush.bf16.msra.mxu0 0
        %451 = vmatpush.bf16.msra.mxu0 0
        %452 = vmatpush.bf16.msra.mxu0 0
        %453 = vmatpush.bf16.msra.mxu0 0
        %454 = vmatpush.bf16.msra.mxu0 %v430
        %455 = vmatmul.bf16.gmra.mxu0 %v442
        %v456 = vpop.f32.mrf.mxu0
        %v457 = vadd.f32 0.0, %v456
        %v458 = vpop.f32.mrf.mxu0
        %v459 = vadd.f32 0.0, %v458
        %460 = vmatmul.bf16.gmra.mxu0 %v445
        %v461 = vpop.f32.mrf.mxu0
        %v462 = vadd.f32 0.0, %v461
        %v463 = vpop.f32.mrf.mxu0
        %v464 = vadd.f32 0.0, %v463
        %465 = vdwg.mxu0
        %v470 = vunpack.c.l.b16 %v410
        %v471 = vunpack.c.l.b16 %v411
        %v472 = vunpack.c.l.b16 %v412
        %v473 = vunpack.c.l.b16 %v413
        %v474 = vpack.c.b16 %v471, %v470
        %v475 = vpack.c.b16 %v473, %v472
        %v477 = vsel %vm380, %v474, 0
        %v480 = vsel %vm380, %v475, 0
        %482 = vmatpush.bf16.msra.mxu0 0
        %483 = vmatpush.bf16.msra.mxu0 0
        %484 = vmatpush.bf16.msra.mxu0 0
        %485 = vmatpush.bf16.msra.mxu0 0
        %486 = vmatpush.bf16.msra.mxu0 0
        %487 = vmatpush.bf16.msra.mxu0 0
        %488 = vmatpush.bf16.msra.mxu0 0
        %489 = vmatpush.bf16.msra.mxu0 %v345
        %490 = vmatmul.bf16.gmra.mxu0 %v477
        %v491 = vpop.f32.mrf.mxu0
        %v492 = vadd.f32 %v457, %v491
        %v493 = vpop.f32.mrf.mxu0
        %v494 = vadd.f32 %v459, %v493
        %495 = vmatmul.bf16.gmra.mxu0 %v480
        %v496 = vpop.f32.mrf.mxu0
        %v497 = vadd.f32 %v462, %v496
        %v498 = vpop.f32.mrf.mxu0
        %v499 = vadd.f32 %v464, %v498
        %500 = vdwg.mxu0
        %501 = vrot.lane.b32.xlu0 %v317, 127
        %v502 = vpop.permute.xlu0 %501
        %503 = vrot.lane.b32.xlu0 %v318, 127
        %v504 = vpop.permute.xlu0 %503
        %v505 = vsel %vm340, 1, 0
        %vm506 = vcmp.eq.s32.totalorder %v505, 1
        %v507 = vsel %vm506, %v502, 0.0
        %v508 = vsel %vm506, %v504, 0.0
        %v509 = vpack.c.bf16 %v508, %v507
        %v514 = vunpack.c.l.b16 %v414
        %v515 = vunpack.c.l.b16 %v415
        %v516 = vunpack.c.l.b16 %v416
        %v517 = vunpack.c.l.b16 %v417
        %v518 = vpack.c.b16 %v515, %v514
        %v519 = vpack.c.b16 %v517, %v516
        %v521 = vsel %vm380, %v518, 0
        %v524 = vsel %vm380, %v519, 0
        %526 = vmatpush.bf16.msra.mxu0 0
        %527 = vmatpush.bf16.msra.mxu0 0
        %528 = vmatpush.bf16.msra.mxu0 0
        %529 = vmatpush.bf16.msra.mxu0 0
        %530 = vmatpush.bf16.msra.mxu0 0
        %531 = vmatpush.bf16.msra.mxu0 0
        %532 = vmatpush.bf16.msra.mxu0 0
        %533 = vmatpush.bf16.msra.mxu0 %v509
        %534 = vmatmul.bf16.gmra.mxu0 %v521
        %v535 = vpop.f32.mrf.mxu0
        %v536 = vadd.f32 0.0, %v535
        %v537 = vpop.f32.mrf.mxu0
        %v538 = vadd.f32 0.0, %v537
        %539 = vmatmul.bf16.gmra.mxu0 %v524
        %v540 = vpop.f32.mrf.mxu0
        %v541 = vadd.f32 0.0, %v540
        %v542 = vpop.f32.mrf.mxu0
        %v543 = vadd.f32 0.0, %v542
        %544 = vdwg.mxu0
        %v545 = vadd.f32 %v492, %v536
        %v546 = vadd.f32 %v494, %v538
        %v547 = vadd.f32 %v497, %v541
        %v548 = vadd.f32 %v499, %v543
        %550 = vset.pattern.permute.xlu0 0
        %551 = vperm.xlu0 %550, %v418
        %v552 = vpop.permute.xlu0 %551
        %555 = vset.pattern.permute.xlu0 0
        %556 = vperm.xlu0 %555, %v419
        %v557 = vpop.permute.xlu0 %556
        %560 = vset.pattern.permute.xlu0 0
        %561 = vperm.xlu0 %560, %v420
        %v562 = vpop.permute.xlu0 %561
        %565 = vset.pattern.permute.xlu0 0
        %566 = vperm.xlu0 %565, %v421
        %v567 = vpop.permute.xlu0 %566
        %v569 = vadd.f32 %v545, %v552
        %v570 = vadd.f32 %v546, %v557
        %v571 = vadd.f32 %v547, %v562
        %v572 = vadd.f32 %v548, %v567
        %v573 = vld [vmem:[%s5] sm:$0xf]
        %v574 = vld [vmem:[%s5 + $0x4] sm:$0xf]
        %v575 = vld [vmem:[%s5 + $0x8] sm:$0xf]
        %v576 = vld [vmem:[%s5 + $0xc] sm:$0xf]
        %v577 = vld [vmem:[%s5 + $0x10] sm:$0xf]
        %v578 = vld [vmem:[%s5 + $0x14] sm:$0xf]
        %v579 = vld [vmem:[%s5 + $0x18] sm:$0xf]
        %v580 = vld [vmem:[%s5 + $0x1c] sm:$0xf]
        %v581 = vld [vmem:[%s5 + $0x20] sm:$0xf]
        %v582 = vld [vmem:[%s5 + $0x24] sm:$0xf]
        %v583 = vld [vmem:[%s5 + $0x28] sm:$0xf]
        %v584 = vld [vmem:[%s5 + $0x2c] sm:$0xf]
        %v585 = vld [vmem:[%s6] sm:$0xff]
        %v586 = vld [vmem:[%s6 + $0x8] sm:$0xff]
        %v587 = vld [vmem:[%s6 + $0x10] sm:$0xff]
        %v588 = vld [vmem:[%s6 + $0x18] sm:$0xff]
        %v589 = vpack.c.bf16 %v570, %v569
        %v590 = vpack.c.bf16 %v572, %v571
        %591 = vrot.lane.b32.xlu0 %v569, 1
        %v592 = vpop.permute.xlu0 %591
        %593 = vrot.lane.b32.xlu0 %v570, 1
        %v594 = vpop.permute.xlu0 %593
        %595 = vrot.lane.b32.xlu0 %v571, 1
        %v596 = vpop.permute.xlu0 %595
        %597 = vrot.lane.b32.xlu0 %v572, 1
        %v598 = vpop.permute.xlu0 %597
        %v599 = vsel %vm427, %v592, 0.0
        %v600 = vsel %vm427, %v594, 0.0
        %v601 = vsel %vm427, %v596, 0.0
        %v602 = vsel %vm427, %v598, 0.0
        %v603 = vpack.c.bf16 %v600, %v599
        %v604 = vpack.c.bf16 %v602, %v601
        %v609 = vunpack.c.l.b16 %v573
        %v610 = vunpack.c.l.b16 %v574
        %v611 = vunpack.c.l.b16 %v575
        %v612 = vunpack.c.l.b16 %v576
        %v613 = vpack.c.b16 %v610, %v609
        %v614 = vpack.c.b16 %v612, %v611
        %vm615 = vcmask 261120
        %v617 = vsel %vm615, %v613, 0
        %v620 = vsel %vm615, %v614, 0
        %622 = vmatpush.bf16.msra.mxu0 0
        %623 = vmatpush.bf16.msra.mxu0 0
        %624 = vmatpush.bf16.msra.mxu0 0
        %625 = vmatpush.bf16.msra.mxu0 0
        %626 = vmatpush.bf16.msra.mxu0 0
        %627 = vmatpush.bf16.msra.mxu0 0
        %628 = vmatpush.bf16.msra.mxu0 %v604
        %629 = vmatpush.bf16.msra.mxu0 %v603
        %630 = vmatmul.bf16.gmra.mxu0 %v617
        %v631 = vpop.f32.mrf.mxu0
        %v632 = vadd.f32 0.0, %v631
        %v633 = vpop.f32.mrf.mxu0
        %v634 = vadd.f32 0.0, %v633
        %635 = vmatmul.bf16.gmra.mxu0 %v620
        %v636 = vpop.f32.mrf.mxu0
        %v637 = vadd.f32 0.0, %v636
        %v638 = vpop.f32.mrf.mxu0
        %v639 = vadd.f32 0.0, %v638
        %640 = vdwg.mxu0
        %v645 = vunpack.c.l.b16 %v577
        %v646 = vunpack.c.l.b16 %v578
        %v647 = vunpack.c.l.b16 %v579
        %v648 = vunpack.c.l.b16 %v580
        %v649 = vpack.c.b16 %v646, %v645
        %v650 = vpack.c.b16 %v648, %v647
        %v652 = vsel %vm615, %v649, 0
        %v655 = vsel %vm615, %v650, 0
        %657 = vmatpush.bf16.msra.mxu0 0
        %658 = vmatpush.bf16.msra.mxu0 0
        %659 = vmatpush.bf16.msra.mxu0 0
        %660 = vmatpush.bf16.msra.mxu0 0
        %661 = vmatpush.bf16.msra.mxu0 0
        %662 = vmatpush.bf16.msra.mxu0 0
        %663 = vmatpush.bf16.msra.mxu0 %v590
        %664 = vmatpush.bf16.msra.mxu0 %v589
        %665 = vmatmul.bf16.gmra.mxu0 %v652
        %v666 = vpop.f32.mrf.mxu0
        %v667 = vadd.f32 %v632, %v666
        %v668 = vpop.f32.mrf.mxu0
        %v669 = vadd.f32 %v634, %v668
        %670 = vmatmul.bf16.gmra.mxu0 %v655
        %v671 = vpop.f32.mrf.mxu0
        %v672 = vadd.f32 %v637, %v671
        %v673 = vpop.f32.mrf.mxu0
        %v674 = vadd.f32 %v639, %v673
        %675 = vdwg.mxu0
        %676 = vrot.lane.b32.xlu0 %v569, 127
        %v677 = vpop.permute.xlu0 %676
        %678 = vrot.lane.b32.xlu0 %v570, 127
        %v679 = vpop.permute.xlu0 %678
        %680 = vrot.lane.b32.xlu0 %v571, 127
        %v681 = vpop.permute.xlu0 %680
        %682 = vrot.lane.b32.xlu0 %v572, 127
        %v683 = vpop.permute.xlu0 %682
        %v684 = vsel %vm506, %v677, 0.0
        %v685 = vsel %vm506, %v679, 0.0
        %v686 = vsel %vm506, %v681, 0.0
        %v687 = vsel %vm506, %v683, 0.0
        %v688 = vpack.c.bf16 %v685, %v684
        %v689 = vpack.c.bf16 %v687, %v686
        %v694 = vunpack.c.l.b16 %v581
        %v695 = vunpack.c.l.b16 %v582
        %v696 = vunpack.c.l.b16 %v583
        %v697 = vunpack.c.l.b16 %v584
        %v698 = vpack.c.b16 %v695, %v694
        %v699 = vpack.c.b16 %v697, %v696
        %v701 = vsel %vm615, %v698, 0
        %v704 = vsel %vm615, %v699, 0
        %706 = vmatpush.bf16.msra.mxu0 0
        %707 = vmatpush.bf16.msra.mxu0 0
        %708 = vmatpush.bf16.msra.mxu0 0
        %709 = vmatpush.bf16.msra.mxu0 0
        %710 = vmatpush.bf16.msra.mxu0 0
        %711 = vmatpush.bf16.msra.mxu0 0
        %712 = vmatpush.bf16.msra.mxu0 %v689
        %713 = vmatpush.bf16.msra.mxu0 %v688
        %714 = vmatmul.bf16.gmra.mxu0 %v701
        %v715 = vpop.f32.mrf.mxu0
        %v716 = vadd.f32 0.0, %v715
        %v717 = vpop.f32.mrf.mxu0
        %v718 = vadd.f32 0.0, %v717
        %719 = vmatmul.bf16.gmra.mxu0 %v704
        %v720 = vpop.f32.mrf.mxu0
        %v721 = vadd.f32 0.0, %v720
        %v722 = vpop.f32.mrf.mxu0
        %v723 = vadd.f32 0.0, %v722
        %724 = vdwg.mxu0
        %v725 = vadd.f32 %v667, %v716
        %v726 = vadd.f32 %v669, %v718
        %v727 = vadd.f32 %v672, %v721
        %v728 = vadd.f32 %v674, %v723
        %730 = vset.pattern.permute.xlu0 0
        %731 = vperm.xlu0 %730, %v585
        %v732 = vpop.permute.xlu0 %731
        %735 = vset.pattern.permute.xlu0 0
        %736 = vperm.xlu0 %735, %v586
        %v737 = vpop.permute.xlu0 %736
        %740 = vset.pattern.permute.xlu0 0
        %741 = vperm.xlu0 %740, %v587
        %v742 = vpop.permute.xlu0 %741
        %745 = vset.pattern.permute.xlu0 0
        %746 = vperm.xlu0 %745, %v588
        %v747 = vpop.permute.xlu0 %746
        %v749 = vadd.f32 %v725, %v732
        %v750 = vadd.f32 %v726, %v737
        %v751 = vadd.f32 %v727, %v742
        %v752 = vadd.f32 %v728, %v747
        %s753 = scalar_lea.vmem %s5, 48
        %v754 = vld [vmem:[%s753] sm:$0xf]
        %v755 = vld [vmem:[%s753 + $0x4] sm:$0xf]
        %v756 = vld [vmem:[%s753 + $0x8] sm:$0xf]
        %v757 = vld [vmem:[%s753 + $0xc] sm:$0xf]
        %v758 = vld [vmem:[%s753 + $0x10] sm:$0xf]
        %v759 = vld [vmem:[%s753 + $0x14] sm:$0xf]
        %v760 = vld [vmem:[%s753 + $0x18] sm:$0xf]
        %v761 = vld [vmem:[%s753 + $0x1c] sm:$0xf]
        %v762 = vld [vmem:[%s753 + $0x20] sm:$0xf]
        %v763 = vld [vmem:[%s753 + $0x24] sm:$0xf]
        %v764 = vld [vmem:[%s753 + $0x28] sm:$0xf]
        %v765 = vld [vmem:[%s753 + $0x2c] sm:$0xf]
        %s766 = scalar_lea.vmem %s6, 32
        %v767 = vld [vmem:[%s766] sm:$0xff]
        %v768 = vld [vmem:[%s766 + $0x8] sm:$0xff]
        %v769 = vld [vmem:[%s766 + $0x10] sm:$0xff]
        %v770 = vld [vmem:[%s766 + $0x18] sm:$0xff]
        %v771 = vpack.c.bf16 %v750, %v749
        %v772 = vpack.c.bf16 %v752, %v751
        %773 = vrot.lane.b32.xlu0 %v749, 1
        %v774 = vpop.permute.xlu0 %773
        %775 = vrot.lane.b32.xlu0 %v750, 1
        %v776 = vpop.permute.xlu0 %775
        %777 = vrot.lane.b32.xlu0 %v751, 1
        %v778 = vpop.permute.xlu0 %777
        %779 = vrot.lane.b32.xlu0 %v752, 1
        %v780 = vpop.permute.xlu0 %779
        %v781 = vsel %vm427, %v774, 0.0
        %v782 = vsel %vm427, %v776, 0.0
        %v783 = vsel %vm427, %v778, 0.0
        %v784 = vsel %vm427, %v780, 0.0
        %v785 = vpack.c.bf16 %v782, %v781
        %v786 = vpack.c.bf16 %v784, %v783
        %v791 = vunpack.c.l.b16 %v754
        %v792 = vunpack.c.l.b16 %v755
        %v793 = vunpack.c.l.b16 %v756
        %v794 = vunpack.c.l.b16 %v757
        %v795 = vpack.c.b16 %v792, %v791
        %v796 = vpack.c.b16 %v794, %v793
        %v798 = vsel %vm615, %v795, 0
        %v801 = vsel %vm615, %v796, 0
        %803 = vmatpush.bf16.msra.mxu0 0
        %804 = vmatpush.bf16.msra.mxu0 0
        %805 = vmatpush.bf16.msra.mxu0 0
        %806 = vmatpush.bf16.msra.mxu0 0
        %807 = vmatpush.bf16.msra.mxu0 0
        %808 = vmatpush.bf16.msra.mxu0 0
        %809 = vmatpush.bf16.msra.mxu0 %v786
        %810 = vmatpush.bf16.msra.mxu0 %v785
        %811 = vmatmul.bf16.gmra.mxu0 %v798
        %v812 = vpop.f32.mrf.mxu0
        %v813 = vadd.f32 0.0, %v812
        %v814 = vpop.f32.mrf.mxu0
        %v815 = vadd.f32 0.0, %v814
        %816 = vmatmul.bf16.gmra.mxu0 %v801
        %v817 = vpop.f32.mrf.mxu0
        %v818 = vadd.f32 0.0, %v817
        %v819 = vpop.f32.mrf.mxu0
        %v820 = vadd.f32 0.0, %v819
        %821 = vdwg.mxu0
        %v826 = vunpack.c.l.b16 %v758
        %v827 = vunpack.c.l.b16 %v759
        %v828 = vunpack.c.l.b16 %v760
        %v829 = vunpack.c.l.b16 %v761
        %v830 = vpack.c.b16 %v827, %v826
        %v831 = vpack.c.b16 %v829, %v828
        %v833 = vsel %vm615, %v830, 0
        %v836 = vsel %vm615, %v831, 0
        %838 = vmatpush.bf16.msra.mxu0 0
        %839 = vmatpush.bf16.msra.mxu0 0
        %840 = vmatpush.bf16.msra.mxu0 0
        %841 = vmatpush.bf16.msra.mxu0 0
        %842 = vmatpush.bf16.msra.mxu0 0
        %843 = vmatpush.bf16.msra.mxu0 0
        %844 = vmatpush.bf16.msra.mxu0 %v772
        %845 = vmatpush.bf16.msra.mxu0 %v771
        %846 = vmatmul.bf16.gmra.mxu0 %v833
        %v847 = vpop.f32.mrf.mxu0
        %v848 = vadd.f32 %v813, %v847
        %v849 = vpop.f32.mrf.mxu0
        %v850 = vadd.f32 %v815, %v849
        %851 = vmatmul.bf16.gmra.mxu0 %v836
        %v852 = vpop.f32.mrf.mxu0
        %v853 = vadd.f32 %v818, %v852
        %v854 = vpop.f32.mrf.mxu0
        %v855 = vadd.f32 %v820, %v854
        %856 = vdwg.mxu0
        %857 = vrot.lane.b32.xlu0 %v749, 127
        %v858 = vpop.permute.xlu0 %857
        %859 = vrot.lane.b32.xlu0 %v750, 127
        %v860 = vpop.permute.xlu0 %859
        %861 = vrot.lane.b32.xlu0 %v751, 127
        %v862 = vpop.permute.xlu0 %861
        %863 = vrot.lane.b32.xlu0 %v752, 127
        %v864 = vpop.permute.xlu0 %863
        %v865 = vsel %vm506, %v858, 0.0
        %v866 = vsel %vm506, %v860, 0.0
        %v867 = vsel %vm506, %v862, 0.0
        %v868 = vsel %vm506, %v864, 0.0
        %v869 = vpack.c.bf16 %v866, %v865
        %v870 = vpack.c.bf16 %v868, %v867
        %v875 = vunpack.c.l.b16 %v762
        %v876 = vunpack.c.l.b16 %v763
        %v877 = vunpack.c.l.b16 %v764
        %v878 = vunpack.c.l.b16 %v765
        %v879 = vpack.c.b16 %v876, %v875
        %v880 = vpack.c.b16 %v878, %v877
        %v882 = vsel %vm615, %v879, 0
        %v885 = vsel %vm615, %v880, 0
        %887 = vmatpush.bf16.msra.mxu0 0
        %888 = vmatpush.bf16.msra.mxu0 0
        %889 = vmatpush.bf16.msra.mxu0 0
        %890 = vmatpush.bf16.msra.mxu0 0
        %891 = vmatpush.bf16.msra.mxu0 0
        %892 = vmatpush.bf16.msra.mxu0 0
        %893 = vmatpush.bf16.msra.mxu0 %v870
        %894 = vmatpush.bf16.msra.mxu0 %v869
        %895 = vmatmul.bf16.gmra.mxu0 %v882
        %v896 = vpop.f32.mrf.mxu0
        %v897 = vadd.f32 0.0, %v896
        %v898 = vpop.f32.mrf.mxu0
        %v899 = vadd.f32 0.0, %v898
        %900 = vmatmul.bf16.gmra.mxu0 %v885
        %v901 = vpop.f32.mrf.mxu0
        %v902 = vadd.f32 0.0, %v901
        %v903 = vpop.f32.mrf.mxu0
        %v904 = vadd.f32 0.0, %v903
        %905 = vdwg.mxu0
        %v906 = vadd.f32 %v848, %v897
        %v907 = vadd.f32 %v850, %v899
        %v908 = vadd.f32 %v853, %v902
        %v909 = vadd.f32 %v855, %v904
        %911 = vset.pattern.permute.xlu0 0
        %912 = vperm.xlu0 %911, %v767
        %v913 = vpop.permute.xlu0 %912
        %916 = vset.pattern.permute.xlu0 0
        %917 = vperm.xlu0 %916, %v768
        %v918 = vpop.permute.xlu0 %917
        %921 = vset.pattern.permute.xlu0 0
        %922 = vperm.xlu0 %921, %v769
        %v923 = vpop.permute.xlu0 %922
        %926 = vset.pattern.permute.xlu0 0
        %927 = vperm.xlu0 %926, %v770
        %v928 = vpop.permute.xlu0 %927
        %v930 = vadd.f32 %v906, %v913
        %v931 = vadd.f32 %v907, %v918
        %v932 = vadd.f32 %v908, %v923
        %v933 = vadd.f32 %v909, %v928
        %s934 = scalar_lea.vmem %s5, 96
        %v935 = vld [vmem:[%s934] sm:$0xf]
        %v936 = vld [vmem:[%s934 + $0x4] sm:$0xf]
        %v937 = vld [vmem:[%s934 + $0x8] sm:$0xf]
        %v938 = vld [vmem:[%s934 + $0xc] sm:$0xf]
        %v939 = vld [vmem:[%s934 + $0x10] sm:$0xf]
        %v940 = vld [vmem:[%s934 + $0x14] sm:$0xf]
        %v941 = vld [vmem:[%s934 + $0x18] sm:$0xf]
        %v942 = vld [vmem:[%s934 + $0x1c] sm:$0xf]
        %v943 = vld [vmem:[%s934 + $0x20] sm:$0xf]
        %v944 = vld [vmem:[%s934 + $0x24] sm:$0xf]
        %v945 = vld [vmem:[%s934 + $0x28] sm:$0xf]
        %v946 = vld [vmem:[%s934 + $0x2c] sm:$0xf]
        %s947 = scalar_lea.vmem %s6, 64
        %v948 = vld [vmem:[%s947] sm:$0xff]
        %v949 = vld [vmem:[%s947 + $0x8] sm:$0xff]
        %v950 = vld [vmem:[%s947 + $0x10] sm:$0xff]
        %v951 = vld [vmem:[%s947 + $0x18] sm:$0xff]
        %v952 = vpack.c.bf16 %v931, %v930
        %v953 = vpack.c.bf16 %v933, %v932
        %954 = vrot.lane.b32.xlu0 %v930, 1
        %v955 = vpop.permute.xlu0 %954
        %956 = vrot.lane.b32.xlu0 %v931, 1
        %v957 = vpop.permute.xlu0 %956
        %958 = vrot.lane.b32.xlu0 %v932, 1
        %v959 = vpop.permute.xlu0 %958
        %960 = vrot.lane.b32.xlu0 %v933, 1
        %v961 = vpop.permute.xlu0 %960
        %v962 = vsel %vm427, %v955, 0.0
        %v963 = vsel %vm427, %v957, 0.0
        %v964 = vsel %vm427, %v959, 0.0
        %v965 = vsel %vm427, %v961, 0.0
        %v966 = vpack.c.bf16 %v963, %v962
        %v967 = vpack.c.bf16 %v965, %v964
        %v972 = vunpack.c.l.b16 %v935
        %v973 = vunpack.c.l.b16 %v936
        %v974 = vunpack.c.l.b16 %v937
        %v975 = vunpack.c.l.b16 %v938
        %v976 = vpack.c.b16 %v973, %v972
        %v977 = vpack.c.b16 %v975, %v974
        %v979 = vsel %vm615, %v976, 0
        %v982 = vsel %vm615, %v977, 0
        %984 = vmatpush.bf16.msra.mxu0 0
        %985 = vmatpush.bf16.msra.mxu0 0
        %986 = vmatpush.bf16.msra.mxu0 0
        %987 = vmatpush.bf16.msra.mxu0 0
        %988 = vmatpush.bf16.msra.mxu0 0
        %989 = vmatpush.bf16.msra.mxu0 0
        %990 = vmatpush.bf16.msra.mxu0 %v967
        %991 = vmatpush.bf16.msra.mxu0 %v966
        %992 = vmatmul.bf16.gmra.mxu0 %v979
        %v993 = vpop.f32.mrf.mxu0
        %v994 = vadd.f32 0.0, %v993
        %v995 = vpop.f32.mrf.mxu0
        %v996 = vadd.f32 0.0, %v995
        %997 = vmatmul.bf16.gmra.mxu0 %v982
        %v998 = vpop.f32.mrf.mxu0
        %v999 = vadd.f32 0.0, %v998
        %v1000 = vpop.f32.mrf.mxu0
        %v1001 = vadd.f32 0.0, %v1000
        %1002 = vdwg.mxu0
        %v1007 = vunpack.c.l.b16 %v939
        %v1008 = vunpack.c.l.b16 %v940
        %v1009 = vunpack.c.l.b16 %v941
        %v1010 = vunpack.c.l.b16 %v942
        %v1011 = vpack.c.b16 %v1008, %v1007
        %v1012 = vpack.c.b16 %v1010, %v1009
        %v1014 = vsel %vm615, %v1011, 0
        %v1017 = vsel %vm615, %v1012, 0
        %1019 = vmatpush.bf16.msra.mxu0 0
        %1020 = vmatpush.bf16.msra.mxu0 0
        %1021 = vmatpush.bf16.msra.mxu0 0
        %1022 = vmatpush.bf16.msra.mxu0 0
        %1023 = vmatpush.bf16.msra.mxu0 0
        %1024 = vmatpush.bf16.msra.mxu0 0
        %1025 = vmatpush.bf16.msra.mxu0 %v953
        %1026 = vmatpush.bf16.msra.mxu0 %v952
        %1027 = vmatmul.bf16.gmra.mxu0 %v1014
        %v1028 = vpop.f32.mrf.mxu0
        %v1029 = vadd.f32 %v994, %v1028
        %v1030 = vpop.f32.mrf.mxu0
        %v1031 = vadd.f32 %v996, %v1030
        %1032 = vmatmul.bf16.gmra.mxu0 %v1017
        %v1033 = vpop.f32.mrf.mxu0
        %v1034 = vadd.f32 %v999, %v1033
        %v1035 = vpop.f32.mrf.mxu0
        %v1036 = vadd.f32 %v1001, %v1035
        %1037 = vdwg.mxu0
        %1038 = vrot.lane.b32.xlu0 %v930, 127
        %v1039 = vpop.permute.xlu0 %1038
        %1040 = vrot.lane.b32.xlu0 %v931, 127
        %v1041 = vpop.permute.xlu0 %1040
        %1042 = vrot.lane.b32.xlu0 %v932, 127
        %v1043 = vpop.permute.xlu0 %1042
        %1044 = vrot.lane.b32.xlu0 %v933, 127
        %v1045 = vpop.permute.xlu0 %1044
        %v1046 = vsel %vm506, %v1039, 0.0
        %v1047 = vsel %vm506, %v1041, 0.0
        %v1048 = vsel %vm506, %v1043, 0.0
        %v1049 = vsel %vm506, %v1045, 0.0
        %v1050 = vpack.c.bf16 %v1047, %v1046
        %v1051 = vpack.c.bf16 %v1049, %v1048
        %v1056 = vunpack.c.l.b16 %v943
        %v1057 = vunpack.c.l.b16 %v944
        %v1058 = vunpack.c.l.b16 %v945
        %v1059 = vunpack.c.l.b16 %v946
        %v1060 = vpack.c.b16 %v1057, %v1056
        %v1061 = vpack.c.b16 %v1059, %v1058
        %v1063 = vsel %vm615, %v1060, 0
        %v1066 = vsel %vm615, %v1061, 0
        %1068 = vmatpush.bf16.msra.mxu0 0
        %1069 = vmatpush.bf16.msra.mxu0 0
        %1070 = vmatpush.bf16.msra.mxu0 0
        %1071 = vmatpush.bf16.msra.mxu0 0
        %1072 = vmatpush.bf16.msra.mxu0 0
        %1073 = vmatpush.bf16.msra.mxu0 0
        %1074 = vmatpush.bf16.msra.mxu0 %v1051
        %1075 = vmatpush.bf16.msra.mxu0 %v1050
        %1076 = vmatmul.bf16.gmra.mxu0 %v1063
        %v1077 = vpop.f32.mrf.mxu0
        %v1078 = vadd.f32 0.0, %v1077
        %v1079 = vpop.f32.mrf.mxu0
        %v1080 = vadd.f32 0.0, %v1079
        %1081 = vmatmul.bf16.gmra.mxu0 %v1066
        %v1082 = vpop.f32.mrf.mxu0
        %v1083 = vadd.f32 0.0, %v1082
        %v1084 = vpop.f32.mrf.mxu0
        %v1085 = vadd.f32 0.0, %v1084
        %1086 = vdwg.mxu0
        %v1087 = vadd.f32 %v1029, %v1078
        %v1088 = vadd.f32 %v1031, %v1080
        %v1089 = vadd.f32 %v1034, %v1083
        %v1090 = vadd.f32 %v1036, %v1085
        %1092 = vset.pattern.permute.xlu0 0
        %1093 = vperm.xlu0 %1092, %v948
        %v1094 = vpop.permute.xlu0 %1093
        %1097 = vset.pattern.permute.xlu0 0
        %1098 = vperm.xlu0 %1097, %v949
        %v1099 = vpop.permute.xlu0 %1098
        %1102 = vset.pattern.permute.xlu0 0
        %1103 = vperm.xlu0 %1102, %v950
        %v1104 = vpop.permute.xlu0 %1103
        %1107 = vset.pattern.permute.xlu0 0
        %1108 = vperm.xlu0 %1107, %v951
        %v1109 = vpop.permute.xlu0 %1108
        %v1111 = vadd.f32 %v1087, %v1094
        %v1112 = vadd.f32 %v1088, %v1099
        %v1113 = vadd.f32 %v1089, %v1104
        %v1114 = vadd.f32 %v1090, %v1109
        %s1115 = scalar_lea.vmem %s5, 144
        %v1116 = vld [vmem:[%s1115] sm:$0xf]
        %v1117 = vld [vmem:[%s1115 + $0x4] sm:$0xf]
        %v1118 = vld [vmem:[%s1115 + $0x8] sm:$0xf]
        %v1119 = vld [vmem:[%s1115 + $0xc] sm:$0xf]
        %v1120 = vld [vmem:[%s1115 + $0x10] sm:$0xf]
        %v1121 = vld [vmem:[%s1115 + $0x14] sm:$0xf]
        %v1122 = vld [vmem:[%s1115 + $0x18] sm:$0xf]
        %v1123 = vld [vmem:[%s1115 + $0x1c] sm:$0xf]
        %v1124 = vld [vmem:[%s1115 + $0x20] sm:$0xf]
        %v1125 = vld [vmem:[%s1115 + $0x24] sm:$0xf]
        %v1126 = vld [vmem:[%s1115 + $0x28] sm:$0xf]
        %v1127 = vld [vmem:[%s1115 + $0x2c] sm:$0xf]
        %s1128 = scalar_lea.vmem %s6, 96
        %v1129 = vld [vmem:[%s1128] sm:$0xff]
        %v1130 = vld [vmem:[%s1128 + $0x8] sm:$0xff]
        %v1131 = vld [vmem:[%s1128 + $0x10] sm:$0xff]
        %v1132 = vld [vmem:[%s1128 + $0x18] sm:$0xff]
        %v1133 = vpack.c.bf16 %v1112, %v1111
        %v1134 = vpack.c.bf16 %v1114, %v1113
        %1135 = vrot.lane.b32.xlu0 %v1111, 1
        %v1136 = vpop.permute.xlu0 %1135
        %1137 = vrot.lane.b32.xlu0 %v1112, 1
        %v1138 = vpop.permute.xlu0 %1137
        %1139 = vrot.lane.b32.xlu0 %v1113, 1
        %v1140 = vpop.permute.xlu0 %1139
        %1141 = vrot.lane.b32.xlu0 %v1114, 1
        %v1142 = vpop.permute.xlu0 %1141
        %v1143 = vsel %vm427, %v1136, 0.0
        %v1144 = vsel %vm427, %v1138, 0.0
        %v1145 = vsel %vm427, %v1140, 0.0
        %v1146 = vsel %vm427, %v1142, 0.0
        %v1147 = vpack.c.bf16 %v1144, %v1143
        %v1148 = vpack.c.bf16 %v1146, %v1145
        %v1153 = vunpack.c.l.b16 %v1116
        %v1154 = vunpack.c.l.b16 %v1117
        %v1155 = vunpack.c.l.b16 %v1118
        %v1156 = vunpack.c.l.b16 %v1119
        %v1157 = vpack.c.b16 %v1154, %v1153
        %v1158 = vpack.c.b16 %v1156, %v1155
        %v1160 = vsel %vm615, %v1157, 0
        %v1163 = vsel %vm615, %v1158, 0
        %1165 = vmatpush.bf16.msra.mxu0 0
        %1166 = vmatpush.bf16.msra.mxu0 0
        %1167 = vmatpush.bf16.msra.mxu0 0
        %1168 = vmatpush.bf16.msra.mxu0 0
        %1169 = vmatpush.bf16.msra.mxu0 0
        %1170 = vmatpush.bf16.msra.mxu0 0
        %1171 = vmatpush.bf16.msra.mxu0 %v1148
        %1172 = vmatpush.bf16.msra.mxu0 %v1147
        %1173 = vmatmul.bf16.gmra.mxu0 %v1160
        %v1174 = vpop.f32.mrf.mxu0
        %v1175 = vadd.f32 0.0, %v1174
        %v1176 = vpop.f32.mrf.mxu0
        %v1177 = vadd.f32 0.0, %v1176
        %1178 = vmatmul.bf16.gmra.mxu0 %v1163
        %v1179 = vpop.f32.mrf.mxu0
        %v1180 = vadd.f32 0.0, %v1179
        %v1181 = vpop.f32.mrf.mxu0
        %v1182 = vadd.f32 0.0, %v1181
        %1183 = vdwg.mxu0
        %v1188 = vunpack.c.l.b16 %v1120
        %v1189 = vunpack.c.l.b16 %v1121
        %v1190 = vunpack.c.l.b16 %v1122
        %v1191 = vunpack.c.l.b16 %v1123
        %v1192 = vpack.c.b16 %v1189, %v1188
        %v1193 = vpack.c.b16 %v1191, %v1190
        %v1195 = vsel %vm615, %v1192, 0
        %v1198 = vsel %vm615, %v1193, 0
        %1200 = vmatpush.bf16.msra.mxu0 0
        %1201 = vmatpush.bf16.msra.mxu0 0
        %1202 = vmatpush.bf16.msra.mxu0 0
        %1203 = vmatpush.bf16.msra.mxu0 0
        %1204 = vmatpush.bf16.msra.mxu0 0
        %1205 = vmatpush.bf16.msra.mxu0 0
        %1206 = vmatpush.bf16.msra.mxu0 %v1134
        %1207 = vmatpush.bf16.msra.mxu0 %v1133
        %1208 = vmatmul.bf16.gmra.mxu0 %v1195
        %v1209 = vpop.f32.mrf.mxu0
        %v1210 = vadd.f32 %v1175, %v1209
        %v1211 = vpop.f32.mrf.mxu0
        %v1212 = vadd.f32 %v1177, %v1211
        %1213 = vmatmul.bf16.gmra.mxu0 %v1198
        %v1214 = vpop.f32.mrf.mxu0
        %v1215 = vadd.f32 %v1180, %v1214
        %v1216 = vpop.f32.mrf.mxu0
        %v1217 = vadd.f32 %v1182, %v1216
        %1218 = vdwg.mxu0
        %1219 = vrot.lane.b32.xlu0 %v1111, 127
        %v1220 = vpop.permute.xlu0 %1219
        %1221 = vrot.lane.b32.xlu0 %v1112, 127
        %v1222 = vpop.permute.xlu0 %1221
        %1223 = vrot.lane.b32.xlu0 %v1113, 127
        %v1224 = vpop.permute.xlu0 %1223
        %1225 = vrot.lane.b32.xlu0 %v1114, 127
        %v1226 = vpop.permute.xlu0 %1225
        %v1227 = vsel %vm506, %v1220, 0.0
        %v1228 = vsel %vm506, %v1222, 0.0
        %v1229 = vsel %vm506, %v1224, 0.0
        %v1230 = vsel %vm506, %v1226, 0.0
        %v1231 = vpack.c.bf16 %v1228, %v1227
        %v1232 = vpack.c.bf16 %v1230, %v1229
        %v1237 = vunpack.c.l.b16 %v1124
        %v1238 = vunpack.c.l.b16 %v1125
        %v1239 = vunpack.c.l.b16 %v1126
        %v1240 = vunpack.c.l.b16 %v1127
        %v1241 = vpack.c.b16 %v1238, %v1237
        %v1242 = vpack.c.b16 %v1240, %v1239
        %v1244 = vsel %vm615, %v1241, 0
        %v1247 = vsel %vm615, %v1242, 0
        %1249 = vmatpush.bf16.msra.mxu0 0
        %1250 = vmatpush.bf16.msra.mxu0 0
        %1251 = vmatpush.bf16.msra.mxu0 0
        %1252 = vmatpush.bf16.msra.mxu0 0
        %1253 = vmatpush.bf16.msra.mxu0 0
        %1254 = vmatpush.bf16.msra.mxu0 0
        %1255 = vmatpush.bf16.msra.mxu0 %v1232
        %1256 = vmatpush.bf16.msra.mxu0 %v1231
        %1257 = vmatmul.bf16.gmra.mxu0 %v1244
        %v1258 = vpop.f32.mrf.mxu0
        %v1259 = vadd.f32 0.0, %v1258
        %v1260 = vpop.f32.mrf.mxu0
        %v1261 = vadd.f32 0.0, %v1260
        %1262 = vmatmul.bf16.gmra.mxu0 %v1247
        %v1263 = vpop.f32.mrf.mxu0
        %v1264 = vadd.f32 0.0, %v1263
        %v1265 = vpop.f32.mrf.mxu0
        %v1266 = vadd.f32 0.0, %v1265
        %1267 = vdwg.mxu0
        %v1268 = vadd.f32 %v1210, %v1259
        %v1269 = vadd.f32 %v1212, %v1261
        %v1270 = vadd.f32 %v1215, %v1264
        %v1271 = vadd.f32 %v1217, %v1266
        %1273 = vset.pattern.permute.xlu0 0
        %1274 = vperm.xlu0 %1273, %v1129
        %v1275 = vpop.permute.xlu0 %1274
        %1278 = vset.pattern.permute.xlu0 0
        %1279 = vperm.xlu0 %1278, %v1130
        %v1280 = vpop.permute.xlu0 %1279
        %1283 = vset.pattern.permute.xlu0 0
        %1284 = vperm.xlu0 %1283, %v1131
        %v1285 = vpop.permute.xlu0 %1284
        %1288 = vset.pattern.permute.xlu0 0
        %1289 = vperm.xlu0 %1288, %v1132
        %v1290 = vpop.permute.xlu0 %1289
        %v1292 = vadd.f32 %v1268, %v1275
        %v1293 = vadd.f32 %v1269, %v1280
        %v1294 = vadd.f32 %v1270, %v1285
        %v1295 = vadd.f32 %v1271, %v1290
        %v1296 = vadd.f32 %v1292, %v397
        %v1297 = vadd.f32 %v1293, %v399
        %v1298 = vadd.f32 %v1294, %v402
        %v1299 = vadd.f32 %v1295, %v404
        %v1300 = vmax.f32 %v1296, 0.0
        %v1301 = vmax.f32 %v1297, 0.0
        %v1302 = vmax.f32 %v1298, 0.0
        %v1303 = vmax.f32 %v1299, 0.0
        %1304 = vst [vmem:[%s315] sm:$0xff] %v1300
        %1305 = vst [vmem:[%s315 + $0x8] sm:$0xff] %v1301
        %1306 = vst [vmem:[%s315 + $0x10] sm:$0xff] %v1302
        %1307 = vst [vmem:[%s315 + $0x18] sm:$0xff] %v1303
        %s1308 = sand.u32 %s181, 1
        %s1309 = scalar_lea.sflag [#allocation4], %s1308
        %s1310 = sand.u32 %s181, 1
        %s1311 = smul.addr %s1310, 32
        %s1312 = scalar_lea.vmem [#allocation3], %s1311
        // Predicated region
        $region87: #{tpu_custom_call.1} parent=81 // pred_check
          %p1313 = pneg %p191
        $region88: #{tpu_custom_call.1} parent=81 // pred_check_branch
          %1315 = sbr.rel (%p1313) target = $region90
        $region89: #{tpu_custom_call.1} parent=81 // pred_region
          %1317 = vsyncadd %s1309, 0
          %s1318 = smul.addr %s21, 8
          %s1319 = scalar_lea.hbm %s7, %s1318
          %s1320 = sshll.u32 %s1312, 4
          %s1321 = int_to_ptr.vmem [resolvable:$true] %s1320
          %s1322 = sshll.u32 %s1319, 4
          %s1323 = int_to_ptr.hbm [resolvable:$true] %s1322
          %1328 = dma.vmem_to_hbm [thread:$0]  %s1321, 512, %s1323, %s1309, 128, 256, 8
        $region90: #{tpu_custom_call.1} parent=81 // pred_fallthru
          _
      $region82: #{tpu_custom_call.1} parent=5 // pred_fallthru
        _
      %p1329 = scmp.le.s32.totalorder 2, %s16
      // Predicated region
      $region91: #{tpu_custom_call.1} parent=5 // pred_check
        %p1330 = pneg %p1329
      $region92: #{tpu_custom_call.1} parent=5 // pred_check_branch
        %1332 = sbr.rel (%p1330) target = $region94
      $region93: #{tpu_custom_call.1} parent=5 // pred_region
        %s1333 = ssub.s32 %s16, 2
        // Predicated region
        $region95: #{tpu_custom_call.1} parent=93 // pred_check
          %p1334 = pneg %p197
        $region96: #{tpu_custom_call.1} parent=93 // pred_check_branch
          %1336 = sbr.rel (%p1334) target = $region98
        $region97: #{tpu_custom_call.1} parent=93 // pred_region
          %s1337 = sand.u32 %s182, 1
          %s1338 = scalar_lea.sflag [#allocation4], %s1337
          %s1339 = sand.u32 %s182, 1
          %s1340 = smul.addr %s1339, 32
          %s1341 = scalar_lea.vmem [#allocation3], %s1340
          %1343 = dma.done %s1338, 512
        $region98: #{tpu_custom_call.1} parent=93 // pred_fallthru
          _
      $region94: #{tpu_custom_call.1} parent=5 // pred_fallthru
        _
    $region6: #{tpu_custom_call.1} parent=1 // loop_footer
      %s20 = sadd.s32 1, %s16
    $region7: #{tpu_custom_call.1} parent=1 // loop_footer_branch
      %15 = sbr.rel target = $region3
    $region8: #{tpu_custom_call.1} parent=1 // loop_exit
      _
    %1344 = vsyncpa [#allocation4], 1
    %s1345 = scalar_lea.sflag [#allocation4], 1
    %1346 = vsyncpa %s1345, 1

</llo_original>
